<compile_context>
chip_gen: v5e
topology: v5e:2x2
jax: 0.10.0
libtpu: 0.0.40
codegen_flags: <defaults>
</compile_context>

<pallas_src>
import functools
import math

import jax
import jax.numpy as jnp
from jax.experimental import pallas as pl
from jax.experimental.pallas import tpu as pltpu

NEG_SLOPE = 0.01  # F.leaky_relu default


def qconv_kernel(m_ref, h_ref, w1bd_ref, w2a_ref, w2bt_ref, b2_ref, out_ref):
    # linear1 for all K messages in one MXU push:
    #   (tile_n, K*F1) @ block_diag(W1 x K) -> (tile_n, K*inter), f32 accumulate
    t = jnp.dot(m_ref[...], w1bd_ref[...], preferred_element_type=jnp.float32)
    t = jnp.maximum(t, NEG_SLOPE * t)  # leaky_relu (single mul+max on the VPU)

    # linear2 on concat([h, h_N]) == h @ W2a + mean_k(tmp_k) @ W2b.
    # The K-way mean is folded into the second matmul: W2b_tiled is W2b/K
    # stacked K times along its input dim, so the reduction rides on the MXU
    # contraction (depth K*inter) instead of lane-slice adds.
    out = (jnp.dot(h_ref[...], w2a_ref[...], preferred_element_type=jnp.float32)
           + jnp.dot(t.astype(w2bt_ref.dtype), w2bt_ref[...],
                     preferred_element_type=jnp.float32)
           + b2_ref[...])
    out_ref[...] = jnp.maximum(out, 0.0)  # relu


@functools.partial(jax.jit, static_argnames=("max_tile_n", "min_grid"))
def qconv_forward(h, nbr_idx, edge_w, w1, w2, b2, *, max_tile_n=4096, min_grid=4):
    """h: (N, in_feat) f32, nbr_idx: (N, K) int32, edge_w: (N, K, 3) f32.
    w1: (inter, in_feat+3) [torch layout], w2: (out, in_feat+inter), b2: (out,)."""
    N, in_feat = h.shape
    K = nbr_idx.shape[1]
    F1 = in_feat + edge_w.shape[-1]
    inter = w1.shape[0]
    out_feat = w2.shape[0]

    # --- mailbox built directly in bf16 (message_func: concat([h[src], w])) ---
    # Casting BEFORE the gather/concat means XLA emits one fused pass that
    # writes the bf16 mailbox once; no f32 intermediate, no separate cast pass.
    h_b = h.astype(jnp.bfloat16)
    m_flat = jnp.concatenate(
        [h_b[nbr_idx], edge_w.astype(jnp.bfloat16)], axis=-1
    ).reshape(N, K * F1)

    # --- weight preprocessing (tiny; fused/cached under jit) ---
    # Block-diagonal W1 -> linear1 over all K messages is one matmul.
    w1_bd = jnp.kron(jnp.eye(K, dtype=w1.dtype), w1.T).astype(jnp.bfloat16)   # (K*F1, K*inter)
    # Split W2 along its input dim (no in-kernel concat); fold the edge-mean's
    # 1/K into the h_N half and tile it K times so the edge sum happens in the
    # MXU contraction.
    w2a = w2[:, :in_feat].T.astype(jnp.bfloat16)                              # (in_feat, out)
    w2bt = jnp.tile((w2[:, in_feat:] / K).T, (K, 1)).astype(jnp.bfloat16)     # (K*inter, out)
    b2_2d = b2.reshape(1, out_feat).astype(jnp.float32)

    # --- tile selection ---
    # multiple of 8, capped by max_tile_n (v5e's 16 MiB scoped-VMEM default is
    # comfortable at 4096; pass max_tile_n=8192 + vmem_limit_bytes on v6e),
    # and >= min_grid tiles when N allows so v7x's 2 TensorCores both get work.
    tile_n = min(max_tile_n, max(8, -(-N // min_grid)))
    tile_n = ((tile_n + 7) // 8) * 8
    n_pad = -(-N // tile_n) * tile_n
    if n_pad != N:  # arbitrary N: pad rows, slice the result back
        m_flat = jnp.pad(m_flat, ((0, n_pad - N), (0, 0)))
        h_b = jnp.pad(h_b, ((0, n_pad - N), (0, 0)))

    grid = (n_pad // tile_n,)

    out = pl.pallas_call(
        qconv_kernel,
        out_shape=jax.ShapeDtypeStruct((n_pad, out_feat), jnp.float32),
        grid_spec=pltpu.PrefetchScalarGridSpec(
            num_scalar_prefetch=0,
            grid=grid,
            in_specs=[
                pl.BlockSpec((tile_n, K * F1), lambda i: (i, 0)),      # mailbox (bf16)
                pl.BlockSpec((tile_n, in_feat), lambda i: (i, 0)),     # h       (bf16)
                pl.BlockSpec((K * F1, K * inter), lambda i: (0, 0)),   # W1 blockdiag
                pl.BlockSpec((in_feat, out_feat), lambda i: (0, 0)),   # W2a
                pl.BlockSpec((K * inter, out_feat), lambda i: (0, 0)), # W2b tiled (with 1/K)
                pl.BlockSpec((1, out_feat), lambda i: (0, 0)),         # b2 (f32)
            ],
            # out_feat=8 < 128 lanes -> masked stores; acceptable since output
            # bytes are small relative to the mailbox stream.
            out_specs=pl.BlockSpec((tile_n, out_feat), lambda i: (i, 0)),
        ),
        compiler_params=pltpu.CompilerParams(
            dimension_semantics=("parallel",)),
    )(m_flat, h_b, w1_bd, w2a, w2bt, b2_2d)

    return out[:N]


def xavier_normal(key, shape, gain):
    fan_out, fan_in = shape
    std = gain * math.sqrt(2.0 / (fan_in + fan_out))
    return std * jax.random.normal(key, shape, dtype=jnp.float32)


def reference(mailbox, h, w1, w2, b2):
    tmp = jnp.einsum('nkf,if->nki', mailbox, w1)
    tmp = jnp.where(tmp > 0, tmp, NEG_SLOPE * tmp)
    h_N = tmp.mean(axis=1)
    h_total = jnp.concatenate([h, h_N], axis=1)
    return jnp.maximum(h_total @ w2.T + b2, 0.0)


if __name__ == "__main__":
    # small synthetic graph: N nodes, each with exactly K incoming edges
    N, K = 2048, 4
    in_feat, inter_dim, out_feat = 8, 16, 8

    key = jax.random.PRNGKey(0)
    k_h, k_w, k_idx, k_w1, k_w2, k_b2 = jax.random.split(key, 6)

    h = jax.random.normal(k_h, (N, in_feat), dtype=jnp.float32)
    edge_w = jax.random.normal(k_w, (N, K, 3), dtype=jnp.float32)     # edges.data['w']
    nbr_idx = jax.random.randint(k_idx, (N, K), 0, N)                 # source node per edge

    gain = math.sqrt(2.0)  # nn.init.calculate_gain('relu')
    w1 = xavier_normal(k_w1, (inter_dim, in_feat + 3), gain)          # linear1 (no bias)
    w2 = xavier_normal(k_w2, (out_feat, in_feat + inter_dim), gain)   # linear2 weight
    b2 = (1.0 / math.sqrt(in_feat + inter_dim)) * (
        2.0 * jax.random.uniform(k_b2, (out_feat,), dtype=jnp.float32) - 1.0)  # linear2 bias

    out = qconv_forward(h, nbr_idx, edge_w, w1, w2, b2)
    out = jax.block_until_ready(out)

    # f32 reference (mailbox built in f32, as the PyTorch module would)
    mailbox = jnp.concatenate([h[nbr_idx], edge_w], axis=-1)          # (N, K, in_feat+3)
    ref = reference(mailbox, h, w1, w2, b2)
    # tolerance loosened for bf16 streaming (f32 accumulation inside the kernel)
    assert jnp.allclose(out, ref, atol=5e-2, rtol=5e-2), "mismatch vs reference"

    print("KERNEL_OK")
</pallas_src>

<mosaic_0001>
module attributes {stable_mosaic.version = 11 : i64} {
  func.func @qconv_kernel(%arg0: i32, %arg1: memref<512x44xbf16, #tpu.memory_space<vmem>>, %arg2: memref<512x8xbf16, #tpu.memory_space<vmem>>, %arg3: memref<44x64xbf16, #tpu.memory_space<vmem>>, %arg4: memref<8x8xbf16, #tpu.memory_space<vmem>>, %arg5: memref<64x8xbf16, #tpu.memory_space<vmem>>, %arg6: memref<1x8xf32, #tpu.memory_space<vmem>>, %arg7: memref<512x8xf32, #tpu.memory_space<vmem>>) attributes {dimension_semantics = [#tpu.dimension_semantics<parallel>], iteration_bounds = array<i64: 4>, scalar_prefetch = 0 : i64, scratch_operands = 0 : i64, tpu.core_type = #tpu.core_type<tc>, window_params = [{transform_indices = @transform_0, window_bounds = array<i64: 512, 44>}, {transform_indices = @transform_1, window_bounds = array<i64: 512, 8>}, {pipeline_mode = #tpu.pipeline_mode<synchronous>, transform_indices = @transform_2, window_bounds = array<i64: 44, 64>}, {pipeline_mode = #tpu.pipeline_mode<synchronous>, transform_indices = @transform_3, window_bounds = array<i64: 8, 8>}, {pipeline_mode = #tpu.pipeline_mode<synchronous>, transform_indices = @transform_4, window_bounds = array<i64: 64, 8>}, {pipeline_mode = #tpu.pipeline_mode<synchronous>, transform_indices = @transform_5, window_bounds = array<i64: 1, 8>}, {transform_indices = @transform_6, window_bounds = array<i64: 512, 8>}]} {
    %c0 = arith.constant 0 : index
    %c0_0 = arith.constant 0 : index
    %0 = vector.load %arg1[%c0, %c0_0] : memref<512x44xbf16, #tpu.memory_space<vmem>>, vector<512x44xbf16>
    %c0_1 = arith.constant 0 : index
    %c0_2 = arith.constant 0 : index
    %1 = vector.load %arg3[%c0_1, %c0_2] : memref<44x64xbf16, #tpu.memory_space<vmem>>, vector<44x64xbf16>
    %cst = arith.constant dense<0.000000e+00> : vector<512x64xf32>
    %2 = tpu.matmul %0, %1, %cst {dimension_numbers = #tpu.dot_dimension_numbers<[1], [0], [0], [1], [0, 0, 1, 1], [], []>} : vector<512x44xbf16>, vector<44x64xbf16>, vector<512x64xf32> -> vector<512x64xf32>
    %cst_3 = arith.constant 0.00999999977 : f32
    %3 = vector.broadcast %cst_3 : f32 to vector<512x64xf32>
    %4 = arith.mulf %3, %2 : vector<512x64xf32>
    %5 = arith.maximumf %2, %4 : vector<512x64xf32>
    %c0_4 = arith.constant 0 : index
    %c0_5 = arith.constant 0 : index
    %6 = vector.load %arg2[%c0_4, %c0_5] : memref<512x8xbf16, #tpu.memory_space<vmem>>, vector<512x8xbf16>
    %c0_6 = arith.constant 0 : index
    %c0_7 = arith.constant 0 : index
    %7 = vector.load %arg4[%c0_6, %c0_7] : memref<8x8xbf16, #tpu.memory_space<vmem>>, vector<8x8xbf16>
    %cst_8 = arith.constant dense<0.000000e+00> : vector<512x8xf32>
    %8 = tpu.matmul %6, %7, %cst_8 {dimension_numbers = #tpu.dot_dimension_numbers<[1], [0], [0], [1], [0, 0, 1, 1], [], []>} : vector<512x8xbf16>, vector<8x8xbf16>, vector<512x8xf32> -> vector<512x8xf32>
    %9 = arith.truncf %5 : vector<512x64xf32> to vector<512x64xbf16>
    %c0_9 = arith.constant 0 : index
    %c0_10 = arith.constant 0 : index
    %10 = vector.load %arg5[%c0_9, %c0_10] : memref<64x8xbf16, #tpu.memory_space<vmem>>, vector<64x8xbf16>
    %cst_11 = arith.constant dense<0.000000e+00> : vector<512x8xf32>
    %11 = tpu.matmul %9, %10, %cst_11 {dimension_numbers = #tpu.dot_dimension_numbers<[1], [0], [0], [1], [0, 0, 1, 1], [], []>} : vector<512x64xbf16>, vector<64x8xbf16>, vector<512x8xf32> -> vector<512x8xf32>
    %12 = arith.addf %8, %11 : vector<512x8xf32>
    %c0_12 = arith.constant 0 : index
    %c0_13 = arith.constant 0 : index
    %13 = vector.load %arg6[%c0_12, %c0_13] : memref<1x8xf32, #tpu.memory_space<vmem>>, vector<1x8xf32>
    %14 = vector.broadcast %13 : vector<1x8xf32> to vector<512x8xf32>
    %15 = arith.addf %12, %14 : vector<512x8xf32>
    %cst_14 = arith.constant 0.000000e+00 : f32
    %16 = vector.broadcast %cst_14 : f32 to vector<512x8xf32>
    %17 = arith.maximumf %15, %16 : vector<512x8xf32>
    %c0_15 = arith.constant 0 : index
    %c0_16 = arith.constant 0 : index
    %18 = vector.load %arg7[%c0_15, %c0_16] : memref<512x8xf32, #tpu.memory_space<vmem>>, vector<512x8xf32>
    tpu.vector_store %arg7[%c0_15, %c0_16], %17 {strides = array<i32>} : memref<512x8xf32, #tpu.memory_space<vmem>>, vector<512x8xf32>,
    return
  }
  func.func @transform_0(%arg0: i32) -> (i32, i32) {
    %c0_i32 = arith.constant 0 : i32
    %c0_i32_0 = arith.constant 0 : i32
    return %arg0, %c0_i32 : i32, i32
  }
  func.func @transform_1(%arg0: i32) -> (i32, i32) {
    %c0_i32 = arith.constant 0 : i32
    %c0_i32_0 = arith.constant 0 : i32
    return %arg0, %c0_i32 : i32, i32
  }
  func.func @transform_2(%arg0: i32) -> (i32, i32) {
    %c0_i32 = arith.constant 0 : i32
    %c0_i32_0 = arith.constant 0 : i32
    %c0_i32_1 = arith.constant 0 : i32
    return %c0_i32, %c0_i32_0 : i32, i32
  }
  func.func @transform_3(%arg0: i32) -> (i32, i32) {
    %c0_i32 = arith.constant 0 : i32
    %c0_i32_0 = arith.constant 0 : i32
    %c0_i32_1 = arith.constant 0 : i32
    return %c0_i32, %c0_i32_0 : i32, i32
  }
  func.func @transform_4(%arg0: i32) -> (i32, i32) {
    %c0_i32 = arith.constant 0 : i32
    %c0_i32_0 = arith.constant 0 : i32
    %c0_i32_1 = arith.constant 0 : i32
    return %c0_i32, %c0_i32_0 : i32, i32
  }
  func.func @transform_5(%arg0: i32) -> (i32, i32) {
    %c0_i32 = arith.constant 0 : i32
    %c0_i32_0 = arith.constant 0 : i32
    %c0_i32_1 = arith.constant 0 : i32
    return %c0_i32, %c0_i32_0 : i32, i32
  }
  func.func @transform_6(%arg0: i32) -> (i32, i32) {
    %c0_i32 = arith.constant 0 : i32
    %c0_i32_0 = arith.constant 0 : i32
    return %arg0, %c0_i32 : i32, i32
  }
}

</mosaic_0001>

<llo_original>
// kernel: qconv_forward.1
$region0: #{qconv_forward.1}
  #allocation0 [shape = 'u32[]', space=smem, size = 0x4, offset = 0x4, fixed_abs, tag = 'smem constant byte address 0x4 - core index']
  #allocation1 [shape = 'u32[72,128]{1,0:T(1,128)}', space=vmem, size = 0x9000, scoped, tag = 'internal scratch']
  %s0 = inlined_call_operand.vmem [shape: bf16[2048,44], index: 0, kind: input, shape index: {}]
  %s1 = inlined_call_operand.vmem [shape: bf16[2048,8], index: 1, kind: input, shape index: {}]
  %s2 = inlined_call_operand.vmem [shape: bf16[44,64], index: 2, kind: input, shape index: {}]
  %s3 = inlined_call_operand.vmem [shape: bf16[8,8], index: 3, kind: input, shape index: {}]
  %s4 = inlined_call_operand.vmem [shape: bf16[64,8], index: 4, kind: input, shape index: {}]
  %s5 = inlined_call_operand.vmem [shape: f32[1,8], index: 5, kind: input, shape index: {}]
  %s6 = inlined_call_operand.vmem [shape: f32[2048,8], index: 6, kind: output, shape index: {}]
  %s7 = sld [smem:[#allocation0]]
  $region57: #{qconv_forward.1} parent=0
    _
  %s9 = ssub.s32 1, %s7
  %s10 = scalar_select 0, %s9, %s7
  loop: start=0, step=1, limit=6
  $region2: #{qconv_forward.1} parent=0 // loop_pre_header
    _
  $region3: #{qconv_forward.1} parent=0 // loop_header
    %s12 = sphi 0, %s16
    %p13 = scmp.ge.s32.totalorder %s12, 6
    %s22 = sphi 0, %s24
    %s25 = sphi 0, %s22
    %s26 = sphi 0, %s25
    %s42 = sphi 0, %s26
    %s48 = sphi 0, %s50
    %s51 = sphi 0, %s48
    %s52 = sphi 0, %s51
    %s68 = sphi 0, %s52
    %s72 = sphi 0, %s72
    %s74 = sphi 0, %s72
    %s75 = sphi 0, %s74
    %s89 = sphi 0, %s75
    %s93 = sphi 0, %s93
    %s95 = sphi 0, %s93
    %s96 = sphi 0, %s95
    %s110 = sphi 0, %s96
    %s114 = sphi 0, %s114
    %s116 = sphi 0, %s114
    %s117 = sphi 0, %s116
    %s131 = sphi 0, %s117
    %s135 = sphi 0, %s135
    %s137 = sphi 0, %s135
    %s138 = sphi 0, %s137
    %s152 = sphi 0, %s138
    %s158 = sphi 0, %s160
    %s161 = sphi 0, %s158
    %s162 = sphi 0, %s161
    %s178 = sphi 0, %s162
  $region4: #{qconv_forward.1} parent=0 // loop_header_branch
    %15 = sbr.rel (%p13) target = $region8
  $region5: #{qconv_forward.1} parent=0 // loop_body
    %s17 = ssub.s32 %s12, 1
    %s18 = ssub.s32 %s12, 2
    %s19 = sadd.s32 %s12, 1
    %s20 = ssub.s32 %s12, %s19
    %p21 = scmp.eq.s32.totalorder %s20, 0
    %s23 = sadd.s32 %s22, 1
    %s24 = scalar_select %p21, %s22, %s23
    %p27 = pneg %p21
    %p28 = scmp.eq.s32.totalorder %s12, 3
    %p29 = por %p27, %p28
    %p30 = scmp.ne.s32.totalorder %s22, %s25
    %p31 = scmp.eq.s32.totalorder %s12, 0
    %p32 = por %p30, %p31
    %p33 = scmp.ne.s32.totalorder %s22, %s25
    %p34 = scmp.eq.s32.totalorder %s17, 3
    %p35 = por %p33, %p34
    %p36 = scmp.ne.s32.totalorder %s25, %s26
    %p37 = scmp.eq.s32.totalorder %s17, 0
    %p38 = por %p36, %p37
    %p39 = scmp.ne.s32.totalorder %s25, %s26
    %p40 = scmp.eq.s32.totalorder %s18, 3
    %p41 = por %p39, %p40
    %p43 = scmp.ne.s32.totalorder %s26, %s42
    %p44 = scmp.eq.s32.totalorder %s18, 0
    %p45 = por %p43, %p44
    %s46 = ssub.s32 %s12, %s19
    %p47 = scmp.eq.s32.totalorder %s46, 0
    %s49 = sadd.s32 %s48, 1
    %s50 = scalar_select %p47, %s48, %s49
    %p53 = pneg %p47
    %p54 = scmp.eq.s32.totalorder %s12, 3
    %p55 = por %p53, %p54
    %p56 = scmp.ne.s32.totalorder %s48, %s51
    %p57 = scmp.eq.s32.totalorder %s12, 0
    %p58 = por %p56, %p57
    %p59 = scmp.ne.s32.totalorder %s48, %s51
    %p60 = scmp.eq.s32.totalorder %s17, 3
    %p61 = por %p59, %p60
    %p62 = scmp.ne.s32.totalorder %s51, %s52
    %p63 = scmp.eq.s32.totalorder %s17, 0
    %p64 = por %p62, %p63
    %p65 = scmp.ne.s32.totalorder %s51, %s52
    %p66 = scmp.eq.s32.totalorder %s18, 3
    %p67 = por %p65, %p66
    %p69 = scmp.ne.s32.totalorder %s52, %s68
    %p70 = scmp.eq.s32.totalorder %s18, 0
    %p71 = por %p69, %p70
    %s73 = sadd.s32 %s72, 1
    %p76 = scmp.eq.s32.totalorder %s12, 3
    %p77 = scmp.ne.s32.totalorder %s72, %s74
    %p78 = scmp.eq.s32.totalorder %s12, 0
    %p79 = por %p77, %p78
    %p80 = scmp.ne.s32.totalorder %s72, %s74
    %p81 = scmp.eq.s32.totalorder %s17, 3
    %p82 = por %p80, %p81
    %p83 = scmp.ne.s32.totalorder %s74, %s75
    %p84 = scmp.eq.s32.totalorder %s17, 0
    %p85 = por %p83, %p84
    %p86 = scmp.ne.s32.totalorder %s74, %s75
    %p87 = scmp.eq.s32.totalorder %s18, 3
    %p88 = por %p86, %p87
    %p90 = scmp.ne.s32.totalorder %s75, %s89
    %p91 = scmp.eq.s32.totalorder %s18, 0
    %p92 = por %p90, %p91
    %s94 = sadd.s32 %s93, 1
    %p97 = scmp.eq.s32.totalorder %s12, 3
    %p98 = scmp.ne.s32.totalorder %s93, %s95
    %p99 = scmp.eq.s32.totalorder %s12, 0
    %p100 = por %p98, %p99
    %p101 = scmp.ne.s32.totalorder %s93, %s95
    %p102 = scmp.eq.s32.totalorder %s17, 3
    %p103 = por %p101, %p102
    %p104 = scmp.ne.s32.totalorder %s95, %s96
    %p105 = scmp.eq.s32.totalorder %s17, 0
    %p106 = por %p104, %p105
    %p107 = scmp.ne.s32.totalorder %s95, %s96
    %p108 = scmp.eq.s32.totalorder %s18, 3
    %p109 = por %p107, %p108
    %p111 = scmp.ne.s32.totalorder %s96, %s110
    %p112 = scmp.eq.s32.totalorder %s18, 0
    %p113 = por %p111, %p112
    %s115 = sadd.s32 %s114, 1
    %p118 = scmp.eq.s32.totalorder %s12, 3
    %p119 = scmp.ne.s32.totalorder %s114, %s116
    %p120 = scmp.eq.s32.totalorder %s12, 0
    %p121 = por %p119, %p120
    %p122 = scmp.ne.s32.totalorder %s114, %s116
    %p123 = scmp.eq.s32.totalorder %s17, 3
    %p124 = por %p122, %p123
    %p125 = scmp.ne.s32.totalorder %s116, %s117
    %p126 = scmp.eq.s32.totalorder %s17, 0
    %p127 = por %p125, %p126
    %p128 = scmp.ne.s32.totalorder %s116, %s117
    %p129 = scmp.eq.s32.totalorder %s18, 3
    %p130 = por %p128, %p129
    %p132 = scmp.ne.s32.totalorder %s117, %s131
    %p133 = scmp.eq.s32.totalorder %s18, 0
    %p134 = por %p132, %p133
    %s136 = sadd.s32 %s135, 1
    %p139 = scmp.eq.s32.totalorder %s12, 3
    %p140 = scmp.ne.s32.totalorder %s135, %s137
    %p141 = scmp.eq.s32.totalorder %s12, 0
    %p142 = por %p140, %p141
    %p143 = scmp.ne.s32.totalorder %s135, %s137
    %p144 = scmp.eq.s32.totalorder %s17, 3
    %p145 = por %p143, %p144
    %p146 = scmp.ne.s32.totalorder %s137, %s138
    %p147 = scmp.eq.s32.totalorder %s17, 0
    %p148 = por %p146, %p147
    %p149 = scmp.ne.s32.totalorder %s137, %s138
    %p150 = scmp.eq.s32.totalorder %s18, 3
    %p151 = por %p149, %p150
    %p153 = scmp.ne.s32.totalorder %s138, %s152
    %p154 = scmp.eq.s32.totalorder %s18, 0
    %p155 = por %p153, %p154
    %s156 = ssub.s32 %s12, %s19
    %p157 = scmp.eq.s32.totalorder %s156, 0
    %s159 = sadd.s32 %s158, 1
    %s160 = scalar_select %p157, %s158, %s159
    %p163 = pneg %p157
    %p164 = scmp.eq.s32.totalorder %s12, 3
    %p165 = por %p163, %p164
    %p166 = scmp.ne.s32.totalorder %s158, %s161
    %p167 = scmp.eq.s32.totalorder %s12, 0
    %p168 = por %p166, %p167
    %p169 = scmp.ne.s32.totalorder %s158, %s161
    %p170 = scmp.eq.s32.totalorder %s17, 3
    %p171 = por %p169, %p170
    %p172 = scmp.ne.s32.totalorder %s161, %s162
    %p173 = scmp.eq.s32.totalorder %s17, 0
    %p174 = por %p172, %p173
    %p175 = scmp.ne.s32.totalorder %s161, %s162
    %p176 = scmp.eq.s32.totalorder %s18, 3
    %p177 = por %p175, %p176
    %p179 = scmp.ne.s32.totalorder %s162, %s178
    %p180 = scmp.eq.s32.totalorder %s18, 0
    %p181 = por %p179, %p180
    %p182 = scmp.le.s32.totalorder 1, %s12
    %p183 = scmp.lt.s32.totalorder %s12, 5
    %p184 = pnand %p182, %p183
    %p185 = pneg %p184
    // Predicated region
    $region9: #{qconv_forward.1} parent=5 // pred_check
      _
    $region10: #{qconv_forward.1} parent=5 // pred_check_branch
      %187 = sbr.rel (%p184) target = $region12
    $region11: #{qconv_forward.1} parent=5 // pred_region
      %s188 = ssub.s32 %s12, 1
      // Predicated region
      $region13: #{qconv_forward.1} parent=11 // pred_check
        %p189 = pneg %p85
      $region14: #{qconv_forward.1} parent=11 // pred_check_branch
        %191 = sbr.rel (%p189) target = $region16
      $region15: #{qconv_forward.1} parent=11 // pred_region
        _
      $region16: #{qconv_forward.1} parent=11 // pred_fallthru
        _
      // Predicated region
      $region17: #{qconv_forward.1} parent=11 // pred_check
        %p192 = pneg %p106
      $region18: #{qconv_forward.1} parent=11 // pred_check_branch
        %194 = sbr.rel (%p192) target = $region20
      $region19: #{qconv_forward.1} parent=11 // pred_region
        _
      $region20: #{qconv_forward.1} parent=11 // pred_fallthru
        _
      // Predicated region
      $region21: #{qconv_forward.1} parent=11 // pred_check
        %p195 = pneg %p127
      $region22: #{qconv_forward.1} parent=11 // pred_check_branch
        %197 = sbr.rel (%p195) target = $region24
      $region23: #{qconv_forward.1} parent=11 // pred_region
        _
      $region24: #{qconv_forward.1} parent=11 // pred_fallthru
        _
      // Predicated region
      $region25: #{qconv_forward.1} parent=11 // pred_check
        %p198 = pneg %p148
      $region26: #{qconv_forward.1} parent=11 // pred_check_branch
        %200 = sbr.rel (%p198) target = $region28
      $region27: #{qconv_forward.1} parent=11 // pred_region
        _
      $region28: #{qconv_forward.1} parent=11 // pred_fallthru
        _
    $region12: #{qconv_forward.1} parent=5 // pred_fallthru
      _
    %p201 = scmp.lt.s32.totalorder %s12, 4
    // Predicated region
    $region29: #{qconv_forward.1} parent=5 // pred_check
      %p202 = pneg %p201
    $region30: #{qconv_forward.1} parent=5 // pred_check_branch
      %204 = sbr.rel (%p202) target = $region32
    $region31: #{qconv_forward.1} parent=5 // pred_region
      // Predicated region
      $region33: #{qconv_forward.1} parent=31 // pred_check
        %p205 = pneg %p32
      $region34: #{qconv_forward.1} parent=31 // pred_check_branch
        %207 = sbr.rel (%p205) target = $region36
      $region35: #{qconv_forward.1} parent=31 // pred_region
        %s208 = smul.u32 64, %s12
        %p209 = scmp.lt.s32.totalorder %s208, 255
        %s210 = scalar_select %p209, %s208, 255
        %s211 = smul.addr %s210, 4
        %s212 = scalar_lea.vmem %s0, %s211
        %s213 = smul.u32 64, %s12
      $region36: #{qconv_forward.1} parent=31 // pred_fallthru
        _
      // Predicated region
      $region37: #{qconv_forward.1} parent=31 // pred_check
        %p214 = pneg %p58
      $region38: #{qconv_forward.1} parent=31 // pred_check_branch
        %216 = sbr.rel (%p214) target = $region40
      $region39: #{qconv_forward.1} parent=31 // pred_region
        %s217 = smul.u32 64, %s12
        %p218 = scmp.lt.s32.totalorder %s217, 255
        %s219 = scalar_select %p218, %s217, 255
        %s220 = smul.addr %s219, 4
        %s221 = scalar_lea.vmem %s1, %s220
        %s222 = smul.u32 64, %s12
      $region40: #{qconv_forward.1} parent=31 // pred_fallthru
        _
    $region32: #{qconv_forward.1} parent=5 // pred_fallthru
      _
    %p223 = scmp.le.s32.totalorder 1, %s12
    %p224 = scmp.lt.s32.totalorder %s12, 5
    %p225 = pnand %p223, %p224
    %p226 = pneg %p225
    // Predicated region
    $region41: #{qconv_forward.1} parent=5 // pred_check
      _
    $region42: #{qconv_forward.1} parent=5 // pred_check_branch
      %228 = sbr.rel (%p225) target = $region44
    $region43: #{qconv_forward.1} parent=5 // pred_region
      %s229 = ssub.s32 %s12, 1
      %s230 = smul.u32 64, %s17
      %p231 = scmp.lt.s32.totalorder %s230, 255
      %s232 = scalar_select %p231, %s230, 255
      %s233 = smul.addr %s232, 4
      %s234 = scalar_lea.vmem %s0, %s233
      %p235 = pneg %p38
      %p236 = pneg %p35
      %s237 = smul.u32 64, %s17
      %p238 = scmp.lt.s32.totalorder %s237, 255
      %s239 = scalar_select %p238, %s237, 255
      %s240 = smul.addr %s239, 4
      %s241 = scalar_lea.vmem %s1, %s240
      %p242 = pneg %p64
      %p243 = pneg %p61
      %p244 = pneg %p85
      %p245 = pneg %p82
      %p246 = pneg %p106
      %p247 = pneg %p103
      %p248 = pneg %p127
      %p249 = pneg %p124
      %p250 = pneg %p148
      %p251 = pneg %p145
      %p252 = pneg %p174
      %p253 = pneg %p171
      %s254 = smul.u32 64, %s17
      %p255 = scmp.lt.s32.totalorder %s254, 255
      %s256 = scalar_select %p255, %s254, 255
      %s257 = smul.addr %s256, 8
      %s258 = scalar_lea.vmem %s6, %s257
      %s259 = smul.u32 64, %s17
      %p260 = scmp.lt.s32.totalorder %s259, 255
      %s261 = scalar_select %p260, %s259, 255
      %s262 = smul.addr %s261, 4
      %s263 = scalar_lea.vmem %s0, %s262
      %s264 = smul.u32 64, %s17
      %s265 = smul.u32 64, %s17
      %p266 = scmp.lt.s32.totalorder %s265, 255
      %s267 = scalar_select %p266, %s265, 255
      %s268 = smul.addr %s267, 4
      %s269 = scalar_lea.vmem %s1, %s268
      %s270 = smul.u32 64, %s17
      %s271 = smul.u32 64, %s17
      %p272 = scmp.lt.s32.totalorder %s271, 255
      %s273 = scalar_select %p272, %s271, 255
      %s274 = smul.addr %s273, 8
      %s275 = scalar_lea.vmem %s6, %s274
      %s276 = smul.u32 64, %s17
      %v278 = vld [vmem:[%s263] sm:$0xf]
      %v279 = vld [vmem:[%s263 + $0x4] sm:$0xf]
      %v280 = vld [vmem:[%s263 + $0x8] sm:$0xf]
      %v281 = vld [vmem:[%s263 + $0xc] sm:$0xf]
      %v282 = vld [vmem:[%s263 + $0x10] sm:$0xf]
      %v283 = vld [vmem:[%s263 + $0x14] sm:$0xf]
      %v284 = vld [vmem:[%s263 + $0x18] sm:$0xf]
      %v285 = vld [vmem:[%s263 + $0x1c] sm:$0xf]
      %v286 = vld [vmem:[%s263 + $0x20] sm:$0xf]
      %v287 = vld [vmem:[%s263 + $0x24] sm:$0xf]
      %v288 = vld [vmem:[%s263 + $0x28] sm:$0xf]
      %v289 = vld [vmem:[%s263 + $0x2c] sm:$0xf]
      %v290 = vld [vmem:[%s263 + $0x30] sm:$0xf]
      %v291 = vld [vmem:[%s263 + $0x34] sm:$0xf]
      %v292 = vld [vmem:[%s263 + $0x38] sm:$0xf]
      %v293 = vld [vmem:[%s263 + $0x3c] sm:$0xf]
      %v294 = vld [vmem:[%s263 + $0x40] sm:$0xf]
      %v295 = vld [vmem:[%s263 + $0x44] sm:$0xf]
      %v296 = vld [vmem:[%s263 + $0x48] sm:$0xf]
      %v297 = vld [vmem:[%s263 + $0x4c] sm:$0xf]
      %v298 = vld [vmem:[%s263 + $0x50] sm:$0xf]
      %v299 = vld [vmem:[%s263 + $0x54] sm:$0xf]
      %v300 = vld [vmem:[%s263 + $0x58] sm:$0xf]
      %v301 = vld [vmem:[%s263 + $0x5c] sm:$0xf]
      %v302 = vld [vmem:[%s263 + $0x60] sm:$0xf]
      %v303 = vld [vmem:[%s263 + $0x64] sm:$0xf]
      %v304 = vld [vmem:[%s263 + $0x68] sm:$0xf]
      %v305 = vld [vmem:[%s263 + $0x6c] sm:$0xf]
      %v306 = vld [vmem:[%s263 + $0x70] sm:$0xf]
      %v307 = vld [vmem:[%s263 + $0x74] sm:$0xf]
      %v308 = vld [vmem:[%s263 + $0x78] sm:$0xf]
      %v309 = vld [vmem:[%s263 + $0x7c] sm:$0xf]
      %v310 = vld [vmem:[%s263 + $0x80] sm:$0xf]
      %v311 = vld [vmem:[%s263 + $0x84] sm:$0xf]
      %v312 = vld [vmem:[%s263 + $0x88] sm:$0xf]
      %v313 = vld [vmem:[%s263 + $0x8c] sm:$0xf]
      %v314 = vld [vmem:[%s263 + $0x90] sm:$0xf]
      %v315 = vld [vmem:[%s263 + $0x94] sm:$0xf]
      %v316 = vld [vmem:[%s263 + $0x98] sm:$0xf]
      %v317 = vld [vmem:[%s263 + $0x9c] sm:$0xf]
      %v318 = vld [vmem:[%s263 + $0xa0] sm:$0xf]
      %v319 = vld [vmem:[%s263 + $0xa4] sm:$0xf]
      %v320 = vld [vmem:[%s263 + $0xa8] sm:$0xf]
      %v321 = vld [vmem:[%s263 + $0xac] sm:$0xf]
      %v322 = vld [vmem:[%s263 + $0xb0] sm:$0xf]
      %v323 = vld [vmem:[%s263 + $0xb4] sm:$0xf]
      %v324 = vld [vmem:[%s263 + $0xb8] sm:$0xf]
      %v325 = vld [vmem:[%s263 + $0xbc] sm:$0xf]
      %v326 = vld [vmem:[%s263 + $0xc0] sm:$0xf]
      %v327 = vld [vmem:[%s263 + $0xc4] sm:$0xf]
      %v328 = vld [vmem:[%s263 + $0xc8] sm:$0xf]
      %v329 = vld [vmem:[%s263 + $0xcc] sm:$0xf]
      %v330 = vld [vmem:[%s263 + $0xd0] sm:$0xf]
      %v331 = vld [vmem:[%s263 + $0xd4] sm:$0xf]
      %v332 = vld [vmem:[%s263 + $0xd8] sm:$0xf]
      %v333 = vld [vmem:[%s263 + $0xdc] sm:$0xf]
      %v334 = vld [vmem:[%s263 + $0xe0] sm:$0xf]
      %v335 = vld [vmem:[%s263 + $0xe4] sm:$0xf]
      %v336 = vld [vmem:[%s263 + $0xe8] sm:$0xf]
      %v337 = vld [vmem:[%s263 + $0xec] sm:$0xf]
      %v338 = vld [vmem:[%s263 + $0xf0] sm:$0xf]
      %v339 = vld [vmem:[%s263 + $0xf4] sm:$0xf]
      %v340 = vld [vmem:[%s263 + $0xf8] sm:$0xf]
      %v341 = vld [vmem:[%s263 + $0xfc] sm:$0xf]
      %v342 = vld [vmem:[%s2] sm:$0xf]
      %v343 = vld [vmem:[%s2 + $0x4] sm:$0xf]
      %v344 = vld [vmem:[%s2 + $0x8] sm:$0xf]
      %v345 = vld [vmem:[%s2 + $0xc] sm:$0xf]
      %v346 = vld [vmem:[%s2 + $0x10] sm:$0xf]
      %v347 = vld [vmem:[%s2 + $0x14] sm:$0x3]
      %v412 = vunpack.c.l.b16 %v278
      %v413 = vunpack.c.l.b16 %v279
      %v414 = vunpack.c.l.b16 %v280
      %v415 = vunpack.c.l.b16 %v281
      %v416 = vunpack.c.l.b16 %v282
      %v417 = vunpack.c.l.b16 %v283
      %v418 = vunpack.c.l.b16 %v284
      %v419 = vunpack.c.l.b16 %v285
      %v420 = vunpack.c.l.b16 %v286
      %v421 = vunpack.c.l.b16 %v287
      %v422 = vunpack.c.l.b16 %v288
      %v423 = vunpack.c.l.b16 %v289
      %v424 = vunpack.c.l.b16 %v290
      %v425 = vunpack.c.l.b16 %v291
      %v426 = vunpack.c.l.b16 %v292
      %v427 = vunpack.c.l.b16 %v293
      %v428 = vunpack.c.l.b16 %v294
      %v429 = vunpack.c.l.b16 %v295
      %v430 = vunpack.c.l.b16 %v296
      %v431 = vunpack.c.l.b16 %v297
      %v432 = vunpack.c.l.b16 %v298
      %v433 = vunpack.c.l.b16 %v299
      %v434 = vunpack.c.l.b16 %v300
      %v435 = vunpack.c.l.b16 %v301
      %v436 = vunpack.c.l.b16 %v302
      %v437 = vunpack.c.l.b16 %v303
      %v438 = vunpack.c.l.b16 %v304
      %v439 = vunpack.c.l.b16 %v305
      %v440 = vunpack.c.l.b16 %v306
      %v441 = vunpack.c.l.b16 %v307
      %v442 = vunpack.c.l.b16 %v308
      %v443 = vunpack.c.l.b16 %v309
      %v444 = vunpack.c.l.b16 %v310
      %v445 = vunpack.c.l.b16 %v311
      %v446 = vunpack.c.l.b16 %v312
      %v447 = vunpack.c.l.b16 %v313
      %v448 = vunpack.c.l.b16 %v314
      %v449 = vunpack.c.l.b16 %v315
      %v450 = vunpack.c.l.b16 %v316
      %v451 = vunpack.c.l.b16 %v317
      %v452 = vunpack.c.l.b16 %v318
      %v453 = vunpack.c.l.b16 %v319
      %v454 = vunpack.c.l.b16 %v320
      %v455 = vunpack.c.l.b16 %v321
      %v456 = vunpack.c.l.b16 %v322
      %v457 = vunpack.c.l.b16 %v323
      %v458 = vunpack.c.l.b16 %v324
      %v459 = vunpack.c.l.b16 %v325
      %v460 = vunpack.c.l.b16 %v326
      %v461 = vunpack.c.l.b16 %v327
      %v462 = vunpack.c.l.b16 %v328
      %v463 = vunpack.c.l.b16 %v329
      %v464 = vunpack.c.l.b16 %v330
      %v465 = vunpack.c.l.b16 %v331
      %v466 = vunpack.c.l.b16 %v332
      %v467 = vunpack.c.l.b16 %v333
      %v468 = vunpack.c.l.b16 %v334
      %v469 = vunpack.c.l.b16 %v335
      %v470 = vunpack.c.l.b16 %v336
      %v471 = vunpack.c.l.b16 %v337
      %v472 = vunpack.c.l.b16 %v338
      %v473 = vunpack.c.l.b16 %v339
      %v474 = vunpack.c.l.b16 %v340
      %v475 = vunpack.c.l.b16 %v341
      %v476 = vpack.c.b16 %v413, %v412
      %v477 = vpack.c.b16 %v415, %v414
      %v478 = vpack.c.b16 %v417, %v416
      %v479 = vpack.c.b16 %v419, %v418
      %v480 = vpack.c.b16 %v421, %v420
      %v481 = vpack.c.b16 %v423, %v422
      %v482 = vpack.c.b16 %v425, %v424
      %v483 = vpack.c.b16 %v427, %v426
      %v484 = vpack.c.b16 %v429, %v428
      %v485 = vpack.c.b16 %v431, %v430
      %v486 = vpack.c.b16 %v433, %v432
      %v487 = vpack.c.b16 %v435, %v434
      %v488 = vpack.c.b16 %v437, %v436
      %v489 = vpack.c.b16 %v439, %v438
      %v490 = vpack.c.b16 %v441, %v440
      %v491 = vpack.c.b16 %v443, %v442
      %v492 = vpack.c.b16 %v445, %v444
      %v493 = vpack.c.b16 %v447, %v446
      %v494 = vpack.c.b16 %v449, %v448
      %v495 = vpack.c.b16 %v451, %v450
      %v496 = vpack.c.b16 %v453, %v452
      %v497 = vpack.c.b16 %v455, %v454
      %v498 = vpack.c.b16 %v457, %v456
      %v499 = vpack.c.b16 %v459, %v458
      %v500 = vpack.c.b16 %v461, %v460
      %v501 = vpack.c.b16 %v463, %v462
      %v502 = vpack.c.b16 %v465, %v464
      %v503 = vpack.c.b16 %v467, %v466
      %v504 = vpack.c.b16 %v469, %v468
      %v505 = vpack.c.b16 %v471, %v470
      %v506 = vpack.c.b16 %v473, %v472
      %v507 = vpack.c.b16 %v475, %v474
      %v514 = vunpack.c.l.b16 %v342
      %v515 = vunpack.c.l.b16 %v343
      %v516 = vunpack.c.l.b16 %v344
      %v517 = vunpack.c.l.b16 %v345
      %v518 = vunpack.c.l.b16 %v346
      %v519 = vunpack.c.l.b16 %v347
      %v520 = vpack.c.b16 %v515, %v514
      %v521 = vpack.c.b16 %v517, %v516
      %v522 = vpack.c.b16 %v519, %v518
      %vm525 = vcmask 359424
      %v527 = vsel %vm525, %v476, 0
      %v530 = vsel %vm525, %v477, 0
      %v533 = vsel %vm525, %v478, 0
      %v536 = vsel %vm525, %v479, 0
      %v539 = vsel %vm525, %v480, 0
      %v542 = vsel %vm525, %v481, 0
      %v545 = vsel %vm525, %v482, 0
      %v548 = vsel %vm525, %v483, 0
      %v551 = vsel %vm525, %v484, 0
      %v554 = vsel %vm525, %v485, 0
      %v557 = vsel %vm525, %v486, 0
      %v560 = vsel %vm525, %v487, 0
      %v563 = vsel %vm525, %v488, 0
      %v566 = vsel %vm525, %v489, 0
      %v569 = vsel %vm525, %v490, 0
      %v572 = vsel %vm525, %v491, 0
      %v575 = vsel %vm525, %v492, 0
      %v578 = vsel %vm525, %v493, 0
      %v581 = vsel %vm525, %v494, 0
      %v584 = vsel %vm525, %v495, 0
      %v587 = vsel %vm525, %v496, 0
      %v590 = vsel %vm525, %v497, 0
      %v593 = vsel %vm525, %v498, 0
      %v596 = vsel %vm525, %v499, 0
      %v599 = vsel %vm525, %v500, 0
      %v602 = vsel %vm525, %v501, 0
      %v605 = vsel %vm525, %v502, 0
      %v608 = vsel %vm525, %v503, 0
      %v611 = vsel %vm525, %v504, 0
      %v614 = vsel %vm525, %v505, 0
      %v617 = vsel %vm525, %v506, 0
      %v620 = vsel %vm525, %v507, 0
      %vm622 = vcmask 1045504
      %v624 = vsel %vm622, %v522, 0
      %626 = vmatpush.bf16.msra.mxu0 0
      %627 = vmatpush.bf16.msra.mxu0 0
      %628 = vmatpush.bf16.msra.mxu0 0
      %629 = vmatpush.bf16.msra.mxu0 0
      %630 = vmatpush.bf16.msra.mxu0 0
      %631 = vmatpush.bf16.msra.mxu0 %v624
      %632 = vmatpush.bf16.msra.mxu0 %v521
      %633 = vmatpush.bf16.msra.mxu0 %v520
      %634 = vmatmul.bf16.gmra.mxu0 %v527
      %v635 = vpop.f32.mrf.mxu0
      %v636 = vadd.f32 0.0, %v635
      %v637 = vpop.f32.mrf.mxu0
      %v638 = vadd.f32 0.0, %v637
      %639 = vmatmul.bf16.gmra.mxu0 %v530
      %v640 = vpop.f32.mrf.mxu0
      %v641 = vadd.f32 0.0, %v640
      %v642 = vpop.f32.mrf.mxu0
      %v643 = vadd.f32 0.0, %v642
      %644 = vmatmul.bf16.gmra.mxu0 %v533
      %v645 = vpop.f32.mrf.mxu0
      %v646 = vadd.f32 0.0, %v645
      %v647 = vpop.f32.mrf.mxu0
      %v648 = vadd.f32 0.0, %v647
      %649 = vmatmul.bf16.gmra.mxu0 %v536
      %v650 = vpop.f32.mrf.mxu0
      %v651 = vadd.f32 0.0, %v650
      %v652 = vpop.f32.mrf.mxu0
      %v653 = vadd.f32 0.0, %v652
      %654 = vmatmul.bf16.gmra.mxu0 %v539
      %v655 = vpop.f32.mrf.mxu0
      %v656 = vadd.f32 0.0, %v655
      %v657 = vpop.f32.mrf.mxu0
      %v658 = vadd.f32 0.0, %v657
      %659 = vmatmul.bf16.gmra.mxu0 %v542
      %v660 = vpop.f32.mrf.mxu0
      %v661 = vadd.f32 0.0, %v660
      %v662 = vpop.f32.mrf.mxu0
      %v663 = vadd.f32 0.0, %v662
      %664 = vmatmul.bf16.gmra.mxu0 %v545
      %v665 = vpop.f32.mrf.mxu0
      %v666 = vadd.f32 0.0, %v665
      %v667 = vpop.f32.mrf.mxu0
      %v668 = vadd.f32 0.0, %v667
      %669 = vmatmul.bf16.gmra.mxu0 %v548
      %v670 = vpop.f32.mrf.mxu0
      %v671 = vadd.f32 0.0, %v670
      %v672 = vpop.f32.mrf.mxu0
      %v673 = vadd.f32 0.0, %v672
      %674 = vmatmul.bf16.gmra.mxu0 %v551
      %v675 = vpop.f32.mrf.mxu0
      %v676 = vadd.f32 0.0, %v675
      %v677 = vpop.f32.mrf.mxu0
      %v678 = vadd.f32 0.0, %v677
      %679 = vmatmul.bf16.gmra.mxu0 %v554
      %v680 = vpop.f32.mrf.mxu0
      %v681 = vadd.f32 0.0, %v680
      %v682 = vpop.f32.mrf.mxu0
      %v683 = vadd.f32 0.0, %v682
      %684 = vmatmul.bf16.gmra.mxu0 %v557
      %v685 = vpop.f32.mrf.mxu0
      %v686 = vadd.f32 0.0, %v685
      %v687 = vpop.f32.mrf.mxu0
      %v688 = vadd.f32 0.0, %v687
      %689 = vmatmul.bf16.gmra.mxu0 %v560
      %v690 = vpop.f32.mrf.mxu0
      %v691 = vadd.f32 0.0, %v690
      %v692 = vpop.f32.mrf.mxu0
      %v693 = vadd.f32 0.0, %v692
      %694 = vmatmul.bf16.gmra.mxu0 %v563
      %v695 = vpop.f32.mrf.mxu0
      %v696 = vadd.f32 0.0, %v695
      %v697 = vpop.f32.mrf.mxu0
      %v698 = vadd.f32 0.0, %v697
      %699 = vmatmul.bf16.gmra.mxu0 %v566
      %v700 = vpop.f32.mrf.mxu0
      %v701 = vadd.f32 0.0, %v700
      %v702 = vpop.f32.mrf.mxu0
      %v703 = vadd.f32 0.0, %v702
      %704 = vmatmul.bf16.gmra.mxu0 %v569
      %v705 = vpop.f32.mrf.mxu0
      %v706 = vadd.f32 0.0, %v705
      %v707 = vpop.f32.mrf.mxu0
      %v708 = vadd.f32 0.0, %v707
      %709 = vmatmul.bf16.gmra.mxu0 %v572
      %v710 = vpop.f32.mrf.mxu0
      %v711 = vadd.f32 0.0, %v710
      %v712 = vpop.f32.mrf.mxu0
      %v713 = vadd.f32 0.0, %v712
      %714 = vmatmul.bf16.gmra.mxu0 %v575
      %v715 = vpop.f32.mrf.mxu0
      %v716 = vadd.f32 0.0, %v715
      %v717 = vpop.f32.mrf.mxu0
      %v718 = vadd.f32 0.0, %v717
      %719 = vmatmul.bf16.gmra.mxu0 %v578
      %v720 = vpop.f32.mrf.mxu0
      %v721 = vadd.f32 0.0, %v720
      %v722 = vpop.f32.mrf.mxu0
      %v723 = vadd.f32 0.0, %v722
      %724 = vmatmul.bf16.gmra.mxu0 %v581
      %v725 = vpop.f32.mrf.mxu0
      %v726 = vadd.f32 0.0, %v725
      %v727 = vpop.f32.mrf.mxu0
      %v728 = vadd.f32 0.0, %v727
      %729 = vmatmul.bf16.gmra.mxu0 %v584
      %v730 = vpop.f32.mrf.mxu0
      %v731 = vadd.f32 0.0, %v730
      %v732 = vpop.f32.mrf.mxu0
      %v733 = vadd.f32 0.0, %v732
      %734 = vmatmul.bf16.gmra.mxu0 %v587
      %v735 = vpop.f32.mrf.mxu0
      %v736 = vadd.f32 0.0, %v735
      %v737 = vpop.f32.mrf.mxu0
      %v738 = vadd.f32 0.0, %v737
      %739 = vmatmul.bf16.gmra.mxu0 %v590
      %v740 = vpop.f32.mrf.mxu0
      %v741 = vadd.f32 0.0, %v740
      %v742 = vpop.f32.mrf.mxu0
      %v743 = vadd.f32 0.0, %v742
      %744 = vmatmul.bf16.gmra.mxu0 %v593
      %v745 = vpop.f32.mrf.mxu0
      %v746 = vadd.f32 0.0, %v745
      %v747 = vpop.f32.mrf.mxu0
      %v748 = vadd.f32 0.0, %v747
      %749 = vmatmul.bf16.gmra.mxu0 %v596
      %v750 = vpop.f32.mrf.mxu0
      %v751 = vadd.f32 0.0, %v750
      %v752 = vpop.f32.mrf.mxu0
      %v753 = vadd.f32 0.0, %v752
      %754 = vmatmul.bf16.gmra.mxu0 %v599
      %v755 = vpop.f32.mrf.mxu0
      %v756 = vadd.f32 0.0, %v755
      %v757 = vpop.f32.mrf.mxu0
      %v758 = vadd.f32 0.0, %v757
      %759 = vmatmul.bf16.gmra.mxu0 %v602
      %v760 = vpop.f32.mrf.mxu0
      %v761 = vadd.f32 0.0, %v760
      %v762 = vpop.f32.mrf.mxu0
      %v763 = vadd.f32 0.0, %v762
      %764 = vmatmul.bf16.gmra.mxu0 %v605
      %v765 = vpop.f32.mrf.mxu0
      %v766 = vadd.f32 0.0, %v765
      %v767 = vpop.f32.mrf.mxu0
      %v768 = vadd.f32 0.0, %v767
      %769 = vmatmul.bf16.gmra.mxu0 %v608
      %v770 = vpop.f32.mrf.mxu0
      %v771 = vadd.f32 0.0, %v770
      %v772 = vpop.f32.mrf.mxu0
      %v773 = vadd.f32 0.0, %v772
      %774 = vmatmul.bf16.gmra.mxu0 %v611
      %v775 = vpop.f32.mrf.mxu0
      %v776 = vadd.f32 0.0, %v775
      %v777 = vpop.f32.mrf.mxu0
      %v778 = vadd.f32 0.0, %v777
      %779 = vmatmul.bf16.gmra.mxu0 %v614
      %v780 = vpop.f32.mrf.mxu0
      %v781 = vadd.f32 0.0, %v780
      %v782 = vpop.f32.mrf.mxu0
      %v783 = vadd.f32 0.0, %v782
      %784 = vmatmul.bf16.gmra.mxu0 %v617
      %v785 = vpop.f32.mrf.mxu0
      %v786 = vadd.f32 0.0, %v785
      %v787 = vpop.f32.mrf.mxu0
      %v788 = vadd.f32 0.0, %v787
      %789 = vmatmul.bf16.gmra.mxu0 %v620
      %v790 = vpop.f32.mrf.mxu0
      %v791 = vadd.f32 0.0, %v790
      %v792 = vpop.f32.mrf.mxu0
      %v793 = vadd.f32 0.0, %v792
      %794 = vdwg.mxu0
      %v795 = vmul.f32 %v636, 0.01
      %v796 = vmul.f32 %v638, 0.01
      %v797 = vmul.f32 %v641, 0.01
      %v798 = vmul.f32 %v643, 0.01
      %v799 = vmul.f32 %v646, 0.01
      %v800 = vmul.f32 %v648, 0.01
      %v801 = vmul.f32 %v651, 0.01
      %v802 = vmul.f32 %v653, 0.01
      %v803 = vmul.f32 %v656, 0.01
      %v804 = vmul.f32 %v658, 0.01
      %v805 = vmul.f32 %v661, 0.01
      %v806 = vmul.f32 %v663, 0.01
      %v807 = vmul.f32 %v666, 0.01
      %v808 = vmul.f32 %v668, 0.01
      %v809 = vmul.f32 %v671, 0.01
      %v810 = vmul.f32 %v673, 0.01
      %v811 = vmul.f32 %v676, 0.01
      %v812 = vmul.f32 %v678, 0.01
      %v813 = vmul.f32 %v681, 0.01
      %v814 = vmul.f32 %v683, 0.01
      %v815 = vmul.f32 %v686, 0.01
      %v816 = vmul.f32 %v688, 0.01
      %v817 = vmul.f32 %v691, 0.01
      %v818 = vmul.f32 %v693, 0.01
      %v819 = vmul.f32 %v696, 0.01
      %v820 = vmul.f32 %v698, 0.01
      %v821 = vmul.f32 %v701, 0.01
      %v822 = vmul.f32 %v703, 0.01
      %v823 = vmul.f32 %v706, 0.01
      %v824 = vmul.f32 %v708, 0.01
      %v825 = vmul.f32 %v711, 0.01
      %v826 = vmul.f32 %v713, 0.01
      %v827 = vmul.f32 %v716, 0.01
      %v828 = vmul.f32 %v718, 0.01
      %v829 = vmul.f32 %v721, 0.01
      %v830 = vmul.f32 %v723, 0.01
      %v831 = vmul.f32 %v726, 0.01
      %v832 = vmul.f32 %v728, 0.01
      %v833 = vmul.f32 %v731, 0.01
      %v834 = vmul.f32 %v733, 0.01
      %v835 = vmul.f32 %v736, 0.01
      %v836 = vmul.f32 %v738, 0.01
      %v837 = vmul.f32 %v741, 0.01
      %v838 = vmul.f32 %v743, 0.01
      %v839 = vmul.f32 %v746, 0.01
      %v840 = vmul.f32 %v748, 0.01
      %v841 = vmul.f32 %v751, 0.01
      %v842 = vmul.f32 %v753, 0.01
      %v843 = vmul.f32 %v756, 0.01
      %v844 = vmul.f32 %v758, 0.01
      %v845 = vmul.f32 %v761, 0.01
      %v846 = vmul.f32 %v763, 0.01
      %v847 = vmul.f32 %v766, 0.01
      %v848 = vmul.f32 %v768, 0.01
      %v849 = vmul.f32 %v771, 0.01
      %v850 = vmul.f32 %v773, 0.01
      %v851 = vmul.f32 %v776, 0.01
      %v852 = vmul.f32 %v778, 0.01
      %v853 = vmul.f32 %v781, 0.01
      %v854 = vmul.f32 %v783, 0.01
      %v855 = vmul.f32 %v786, 0.01
      %v856 = vmul.f32 %v788, 0.01
      %v857 = vmul.f32 %v791, 0.01
      %v858 = vmul.f32 %v793, 0.01
      %v859 = vmax.f32 %v636, %v795
      %v860 = vmax.f32 %v638, %v796
      %v861 = vmax.f32 %v641, %v797
      %v862 = vmax.f32 %v643, %v798
      %v863 = vmax.f32 %v646, %v799
      %v864 = vmax.f32 %v648, %v800
      %v865 = vmax.f32 %v651, %v801
      %v866 = vmax.f32 %v653, %v802
      %v867 = vmax.f32 %v656, %v803
      %v868 = vmax.f32 %v658, %v804
      %v869 = vmax.f32 %v661, %v805
      %v870 = vmax.f32 %v663, %v806
      %v871 = vmax.f32 %v666, %v807
      %v872 = vmax.f32 %v668, %v808
      %v873 = vmax.f32 %v671, %v809
      %v874 = vmax.f32 %v673, %v810
      %v875 = vmax.f32 %v676, %v811
      %v876 = vmax.f32 %v678, %v812
      %v877 = vmax.f32 %v681, %v813
      %v878 = vmax.f32 %v683, %v814
      %v879 = vmax.f32 %v686, %v815
      %v880 = vmax.f32 %v688, %v816
      %v881 = vmax.f32 %v691, %v817
      %v882 = vmax.f32 %v693, %v818
      %v883 = vmax.f32 %v696, %v819
      %v884 = vmax.f32 %v698, %v820
      %v885 = vmax.f32 %v701, %v821
      %v886 = vmax.f32 %v703, %v822
      %v887 = vmax.f32 %v706, %v823
      %v888 = vmax.f32 %v708, %v824
      %v889 = vmax.f32 %v711, %v825
      %v890 = vmax.f32 %v713, %v826
      %v891 = vmax.f32 %v716, %v827
      %v892 = vmax.f32 %v718, %v828
      %v893 = vmax.f32 %v721, %v829
      %v894 = vmax.f32 %v723, %v830
      %v895 = vmax.f32 %v726, %v831
      %v896 = vmax.f32 %v728, %v832
      %v897 = vmax.f32 %v731, %v833
      %v898 = vmax.f32 %v733, %v834
      %v899 = vmax.f32 %v736, %v835
      %v900 = vmax.f32 %v738, %v836
      %v901 = vmax.f32 %v741, %v837
      %v902 = vmax.f32 %v743, %v838
      %v903 = vmax.f32 %v746, %v839
      %v904 = vmax.f32 %v748, %v840
      %v905 = vmax.f32 %v751, %v841
      %v906 = vmax.f32 %v753, %v842
      %v907 = vmax.f32 %v756, %v843
      %v908 = vmax.f32 %v758, %v844
      %v909 = vmax.f32 %v761, %v845
      %v910 = vmax.f32 %v763, %v846
      %v911 = vmax.f32 %v766, %v847
      %v912 = vmax.f32 %v768, %v848
      %v913 = vmax.f32 %v771, %v849
      %v914 = vmax.f32 %v773, %v850
      %v915 = vmax.f32 %v776, %v851
      %v916 = vmax.f32 %v778, %v852
      %v917 = vmax.f32 %v781, %v853
      %v918 = vmax.f32 %v783, %v854
      %v919 = vmax.f32 %v786, %v855
      %v920 = vmax.f32 %v788, %v856
      %v921 = vmax.f32 %v791, %v857
      %v922 = vmax.f32 %v793, %v858
      %v923 = vld [vmem:[%s269] sm:$0xf]
      %v924 = vld [vmem:[%s269 + $0x4] sm:$0xf]
      %v925 = vld [vmem:[%s269 + $0x8] sm:$0xf]
      %v926 = vld [vmem:[%s269 + $0xc] sm:$0xf]
      %v927 = vld [vmem:[%s269 + $0x10] sm:$0xf]
      %v928 = vld [vmem:[%s269 + $0x14] sm:$0xf]
      %v929 = vld [vmem:[%s269 + $0x18] sm:$0xf]
      %v930 = vld [vmem:[%s269 + $0x1c] sm:$0xf]
      %v931 = vld [vmem:[%s269 + $0x20] sm:$0xf]
      %v932 = vld [vmem:[%s269 + $0x24] sm:$0xf]
      %v933 = vld [vmem:[%s269 + $0x28] sm:$0xf]
      %v934 = vld [vmem:[%s269 + $0x2c] sm:$0xf]
      %v935 = vld [vmem:[%s269 + $0x30] sm:$0xf]
      %v936 = vld [vmem:[%s269 + $0x34] sm:$0xf]
      %v937 = vld [vmem:[%s269 + $0x38] sm:$0xf]
      %v938 = vld [vmem:[%s269 + $0x3c] sm:$0xf]
      %v939 = vld [vmem:[%s269 + $0x40] sm:$0xf]
      %v940 = vld [vmem:[%s269 + $0x44] sm:$0xf]
      %v941 = vld [vmem:[%s269 + $0x48] sm:$0xf]
      %v942 = vld [vmem:[%s269 + $0x4c] sm:$0xf]
      %v943 = vld [vmem:[%s269 + $0x50] sm:$0xf]
      %v944 = vld [vmem:[%s269 + $0x54] sm:$0xf]
      %v945 = vld [vmem:[%s269 + $0x58] sm:$0xf]
      %v946 = vld [vmem:[%s269 + $0x5c] sm:$0xf]
      %v947 = vld [vmem:[%s269 + $0x60] sm:$0xf]
      %v948 = vld [vmem:[%s269 + $0x64] sm:$0xf]
      %v949 = vld [vmem:[%s269 + $0x68] sm:$0xf]
      %v950 = vld [vmem:[%s269 + $0x6c] sm:$0xf]
      %v951 = vld [vmem:[%s269 + $0x70] sm:$0xf]
      %v952 = vld [vmem:[%s269 + $0x74] sm:$0xf]
      %v953 = vld [vmem:[%s269 + $0x78] sm:$0xf]
      %v954 = vld [vmem:[%s269 + $0x7c] sm:$0xf]
      %v955 = vld [vmem:[%s269 + $0x80] sm:$0xf]
      %v956 = vld [vmem:[%s269 + $0x84] sm:$0xf]
      %v957 = vld [vmem:[%s269 + $0x88] sm:$0xf]
      %v958 = vld [vmem:[%s269 + $0x8c] sm:$0xf]
      %v959 = vld [vmem:[%s269 + $0x90] sm:$0xf]
      %v960 = vld [vmem:[%s269 + $0x94] sm:$0xf]
      %v961 = vld [vmem:[%s269 + $0x98] sm:$0xf]
      %v962 = vld [vmem:[%s269 + $0x9c] sm:$0xf]
      %v963 = vld [vmem:[%s269 + $0xa0] sm:$0xf]
      %v964 = vld [vmem:[%s269 + $0xa4] sm:$0xf]
      %v965 = vld [vmem:[%s269 + $0xa8] sm:$0xf]
      %v966 = vld [vmem:[%s269 + $0xac] sm:$0xf]
      %v967 = vld [vmem:[%s269 + $0xb0] sm:$0xf]
      %v968 = vld [vmem:[%s269 + $0xb4] sm:$0xf]
      %v969 = vld [vmem:[%s269 + $0xb8] sm:$0xf]
      %v970 = vld [vmem:[%s269 + $0xbc] sm:$0xf]
      %v971 = vld [vmem:[%s269 + $0xc0] sm:$0xf]
      %v972 = vld [vmem:[%s269 + $0xc4] sm:$0xf]
      %v973 = vld [vmem:[%s269 + $0xc8] sm:$0xf]
      %v974 = vld [vmem:[%s269 + $0xcc] sm:$0xf]
      %v975 = vld [vmem:[%s269 + $0xd0] sm:$0xf]
      %v976 = vld [vmem:[%s269 + $0xd4] sm:$0xf]
      %v977 = vld [vmem:[%s269 + $0xd8] sm:$0xf]
      %v978 = vld [vmem:[%s269 + $0xdc] sm:$0xf]
      %v979 = vld [vmem:[%s269 + $0xe0] sm:$0xf]
      %v980 = vld [vmem:[%s269 + $0xe4] sm:$0xf]
      %v981 = vld [vmem:[%s269 + $0xe8] sm:$0xf]
      %v982 = vld [vmem:[%s269 + $0xec] sm:$0xf]
      %v983 = vld [vmem:[%s269 + $0xf0] sm:$0xf]
      %v984 = vld [vmem:[%s269 + $0xf4] sm:$0xf]
      %v985 = vld [vmem:[%s269 + $0xf8] sm:$0xf]
      %v986 = vld [vmem:[%s269 + $0xfc] sm:$0xf]
      %v987 = vld [vmem:[%s3] sm:$0xf]
      %v988 = vpack.c.bf16 %v860, %v859
      %v989 = vpack.c.bf16 %v862, %v861
      %v990 = vpack.c.bf16 %v864, %v863
      %v991 = vpack.c.bf16 %v866, %v865
      %v992 = vpack.c.bf16 %v868, %v867
      %v993 = vpack.c.bf16 %v870, %v869
      %v994 = vpack.c.bf16 %v872, %v871
      %v995 = vpack.c.bf16 %v874, %v873
      %v996 = vpack.c.bf16 %v876, %v875
      %v997 = vpack.c.bf16 %v878, %v877
      %v998 = vpack.c.bf16 %v880, %v879
      %v999 = vpack.c.bf16 %v882, %v881
      %v1000 = vpack.c.bf16 %v884, %v883
      %v1001 = vpack.c.bf16 %v886, %v885
      %v1002 = vpack.c.bf16 %v888, %v887
      %v1003 = vpack.c.bf16 %v890, %v889
      %v1004 = vpack.c.bf16 %v892, %v891
      %v1005 = vpack.c.bf16 %v894, %v893
      %v1006 = vpack.c.bf16 %v896, %v895
      %v1007 = vpack.c.bf16 %v898, %v897
      %v1008 = vpack.c.bf16 %v900, %v899
      %v1009 = vpack.c.bf16 %v902, %v901
      %v1010 = vpack.c.bf16 %v904, %v903
      %v1011 = vpack.c.bf16 %v906, %v905
      %v1012 = vpack.c.bf16 %v908, %v907
      %v1013 = vpack.c.bf16 %v910, %v909
      %v1014 = vpack.c.bf16 %v912, %v911
      %v1015 = vpack.c.bf16 %v914, %v913
      %v1016 = vpack.c.bf16 %v916, %v915
      %v1017 = vpack.c.bf16 %v918, %v917
      %v1018 = vpack.c.bf16 %v920, %v919
      %v1019 = vpack.c.bf16 %v922, %v921
      %v1020 = vld [vmem:[%s4] sm:$0xf]
      %v1021 = vld [vmem:[%s4 + $0x4] sm:$0xf]
      %v1022 = vld [vmem:[%s4 + $0x8] sm:$0xf]
      %v1023 = vld [vmem:[%s4 + $0xc] sm:$0xf]
      %v1024 = vld [vmem:[%s4 + $0x10] sm:$0xf]
      %v1025 = vld [vmem:[%s4 + $0x14] sm:$0xf]
      %v1026 = vld [vmem:[%s4 + $0x18] sm:$0xf]
      %v1027 = vld [vmem:[%s4 + $0x1c] sm:$0xf]
      %v1036 = vunpack.c.l.b16 %v1020
      %v1037 = vunpack.c.l.b16 %v1021
      %v1038 = vunpack.c.l.b16 %v1022
      %v1039 = vunpack.c.l.b16 %v1023
      %v1040 = vunpack.c.l.b16 %v1024
      %v1041 = vunpack.c.l.b16 %v1025
      %v1042 = vunpack.c.l.b16 %v1026
      %v1043 = vunpack.c.l.b16 %v1027
      %v1044 = vpack.c.b16 %v1037, %v1036
      %v1045 = vpack.c.b16 %v1039, %v1038
      %v1046 = vpack.c.b16 %v1041, %v1040
      %v1047 = vpack.c.b16 %v1043, %v1042
      %vm1052 = vcmask 523264
      %v1054 = vsel %vm1052, %v988, 0
      %v1057 = vsel %vm1052, %v989, 0
      %v1060 = vsel %vm1052, %v990, 0
      %v1063 = vsel %vm1052, %v991, 0
      %v1066 = vsel %vm1052, %v992, 0
      %v1069 = vsel %vm1052, %v993, 0
      %v1072 = vsel %vm1052, %v994, 0
      %v1075 = vsel %vm1052, %v995, 0
      %v1078 = vsel %vm1052, %v996, 0
      %v1081 = vsel %vm1052, %v997, 0
      %v1084 = vsel %vm1052, %v998, 0
      %v1087 = vsel %vm1052, %v999, 0
      %v1090 = vsel %vm1052, %v1000, 0
      %v1093 = vsel %vm1052, %v1001, 0
      %v1096 = vsel %vm1052, %v1002, 0
      %v1099 = vsel %vm1052, %v1003, 0
      %v1102 = vsel %vm1052, %v1004, 0
      %v1105 = vsel %vm1052, %v1005, 0
      %v1108 = vsel %vm1052, %v1006, 0
      %v1111 = vsel %vm1052, %v1007, 0
      %v1114 = vsel %vm1052, %v1008, 0
      %v1117 = vsel %vm1052, %v1009, 0
      %v1120 = vsel %vm1052, %v1010, 0
      %v1123 = vsel %vm1052, %v1011, 0
      %v1126 = vsel %vm1052, %v1012, 0
      %v1129 = vsel %vm1052, %v1013, 0
      %v1132 = vsel %vm1052, %v1014, 0
      %v1135 = vsel %vm1052, %v1015, 0
      %v1138 = vsel %vm1052, %v1016, 0
      %v1141 = vsel %vm1052, %v1017, 0
      %v1144 = vsel %vm1052, %v1018, 0
      %v1147 = vsel %vm1052, %v1019, 0
      %1149 = vmatpush.bf16.msra.mxu0 0
      %1150 = vmatpush.bf16.msra.mxu0 0
      %1151 = vmatpush.bf16.msra.mxu0 0
      %1152 = vmatpush.bf16.msra.mxu0 0
      %1153 = vmatpush.bf16.msra.mxu0 %v1047
      %1154 = vmatpush.bf16.msra.mxu0 %v1046
      %1155 = vmatpush.bf16.msra.mxu0 %v1045
      %1156 = vmatpush.bf16.msra.mxu0 %v1044
      %1157 = vmatmul.bf16.gmra.mxu0 %v1054
      %v1158 = vpop.f32.mrf.mxu0
      %v1159 = vadd.f32 0.0, %v1158
      %v1160 = vpop.f32.mrf.mxu0
      %v1161 = vadd.f32 0.0, %v1160
      %1162 = vmatmul.bf16.gmra.mxu0 %v1057
      %v1163 = vpop.f32.mrf.mxu0
      %v1164 = vadd.f32 0.0, %v1163
      %v1165 = vpop.f32.mrf.mxu0
      %v1166 = vadd.f32 0.0, %v1165
      %1167 = vmatmul.bf16.gmra.mxu0 %v1060
      %v1168 = vpop.f32.mrf.mxu0
      %v1169 = vadd.f32 0.0, %v1168
      %v1170 = vpop.f32.mrf.mxu0
      %v1171 = vadd.f32 0.0, %v1170
      %1172 = vmatmul.bf16.gmra.mxu0 %v1063
      %v1173 = vpop.f32.mrf.mxu0
      %v1174 = vadd.f32 0.0, %v1173
      %v1175 = vpop.f32.mrf.mxu0
      %v1176 = vadd.f32 0.0, %v1175
      %1177 = vmatmul.bf16.gmra.mxu0 %v1066
      %v1178 = vpop.f32.mrf.mxu0
      %v1179 = vadd.f32 0.0, %v1178
      %v1180 = vpop.f32.mrf.mxu0
      %v1181 = vadd.f32 0.0, %v1180
      %1182 = vmatmul.bf16.gmra.mxu0 %v1069
      %v1183 = vpop.f32.mrf.mxu0
      %v1184 = vadd.f32 0.0, %v1183
      %v1185 = vpop.f32.mrf.mxu0
      %v1186 = vadd.f32 0.0, %v1185
      %1187 = vmatmul.bf16.gmra.mxu0 %v1072
      %v1188 = vpop.f32.mrf.mxu0
      %v1189 = vadd.f32 0.0, %v1188
      %v1190 = vpop.f32.mrf.mxu0
      %v1191 = vadd.f32 0.0, %v1190
      %1192 = vmatmul.bf16.gmra.mxu0 %v1075
      %v1193 = vpop.f32.mrf.mxu0
      %v1194 = vadd.f32 0.0, %v1193
      %v1195 = vpop.f32.mrf.mxu0
      %v1196 = vadd.f32 0.0, %v1195
      %1197 = vmatmul.bf16.gmra.mxu0 %v1078
      %v1198 = vpop.f32.mrf.mxu0
      %v1199 = vadd.f32 0.0, %v1198
      %v1200 = vpop.f32.mrf.mxu0
      %v1201 = vadd.f32 0.0, %v1200
      %1202 = vmatmul.bf16.gmra.mxu0 %v1081
      %v1203 = vpop.f32.mrf.mxu0
      %v1204 = vadd.f32 0.0, %v1203
      %v1205 = vpop.f32.mrf.mxu0
      %v1206 = vadd.f32 0.0, %v1205
      %1207 = vmatmul.bf16.gmra.mxu0 %v1084
      %v1208 = vpop.f32.mrf.mxu0
      %v1209 = vadd.f32 0.0, %v1208
      %v1210 = vpop.f32.mrf.mxu0
      %v1211 = vadd.f32 0.0, %v1210
      %1212 = vmatmul.bf16.gmra.mxu0 %v1087
      %v1213 = vpop.f32.mrf.mxu0
      %v1214 = vadd.f32 0.0, %v1213
      %v1215 = vpop.f32.mrf.mxu0
      %v1216 = vadd.f32 0.0, %v1215
      %1217 = vmatmul.bf16.gmra.mxu0 %v1090
      %v1218 = vpop.f32.mrf.mxu0
      %v1219 = vadd.f32 0.0, %v1218
      %v1220 = vpop.f32.mrf.mxu0
      %v1221 = vadd.f32 0.0, %v1220
      %1222 = vmatmul.bf16.gmra.mxu0 %v1093
      %v1223 = vpop.f32.mrf.mxu0
      %v1224 = vadd.f32 0.0, %v1223
      %v1225 = vpop.f32.mrf.mxu0
      %v1226 = vadd.f32 0.0, %v1225
      %1227 = vmatmul.bf16.gmra.mxu0 %v1096
      %v1228 = vpop.f32.mrf.mxu0
      %v1229 = vadd.f32 0.0, %v1228
      %v1230 = vpop.f32.mrf.mxu0
      %v1231 = vadd.f32 0.0, %v1230
      %1232 = vmatmul.bf16.gmra.mxu0 %v1099
      %v1233 = vpop.f32.mrf.mxu0
      %v1234 = vadd.f32 0.0, %v1233
      %v1235 = vpop.f32.mrf.mxu0
      %v1236 = vadd.f32 0.0, %v1235
      %1237 = vmatmul.bf16.gmra.mxu0 %v1102
      %v1238 = vpop.f32.mrf.mxu0
      %v1239 = vadd.f32 0.0, %v1238
      %v1240 = vpop.f32.mrf.mxu0
      %v1241 = vadd.f32 0.0, %v1240
      %1242 = vmatmul.bf16.gmra.mxu0 %v1105
      %v1243 = vpop.f32.mrf.mxu0
      %v1244 = vadd.f32 0.0, %v1243
      %v1245 = vpop.f32.mrf.mxu0
      %v1246 = vadd.f32 0.0, %v1245
      %1247 = vmatmul.bf16.gmra.mxu0 %v1108
      %v1248 = vpop.f32.mrf.mxu0
      %v1249 = vadd.f32 0.0, %v1248
      %v1250 = vpop.f32.mrf.mxu0
      %v1251 = vadd.f32 0.0, %v1250
      %1252 = vmatmul.bf16.gmra.mxu0 %v1111
      %v1253 = vpop.f32.mrf.mxu0
      %v1254 = vadd.f32 0.0, %v1253
      %v1255 = vpop.f32.mrf.mxu0
      %v1256 = vadd.f32 0.0, %v1255
      %1257 = vmatmul.bf16.gmra.mxu0 %v1114
      %v1258 = vpop.f32.mrf.mxu0
      %v1259 = vadd.f32 0.0, %v1258
      %v1260 = vpop.f32.mrf.mxu0
      %v1261 = vadd.f32 0.0, %v1260
      %1262 = vmatmul.bf16.gmra.mxu0 %v1117
      %v1263 = vpop.f32.mrf.mxu0
      %v1264 = vadd.f32 0.0, %v1263
      %v1265 = vpop.f32.mrf.mxu0
      %v1266 = vadd.f32 0.0, %v1265
      %1267 = vmatmul.bf16.gmra.mxu0 %v1120
      %v1268 = vpop.f32.mrf.mxu0
      %v1269 = vadd.f32 0.0, %v1268
      %v1270 = vpop.f32.mrf.mxu0
      %v1271 = vadd.f32 0.0, %v1270
      %1272 = vmatmul.bf16.gmra.mxu0 %v1123
      %v1273 = vpop.f32.mrf.mxu0
      %v1274 = vadd.f32 0.0, %v1273
      %v1275 = vpop.f32.mrf.mxu0
      %v1276 = vadd.f32 0.0, %v1275
      %1277 = vmatmul.bf16.gmra.mxu0 %v1126
      %v1278 = vpop.f32.mrf.mxu0
      %v1279 = vadd.f32 0.0, %v1278
      %v1280 = vpop.f32.mrf.mxu0
      %v1281 = vadd.f32 0.0, %v1280
      %1282 = vmatmul.bf16.gmra.mxu0 %v1129
      %v1283 = vpop.f32.mrf.mxu0
      %v1284 = vadd.f32 0.0, %v1283
      %v1285 = vpop.f32.mrf.mxu0
      %v1286 = vadd.f32 0.0, %v1285
      %1287 = vmatmul.bf16.gmra.mxu0 %v1132
      %v1288 = vpop.f32.mrf.mxu0
      %v1289 = vadd.f32 0.0, %v1288
      %v1290 = vpop.f32.mrf.mxu0
      %v1291 = vadd.f32 0.0, %v1290
      %1292 = vmatmul.bf16.gmra.mxu0 %v1135
      %v1293 = vpop.f32.mrf.mxu0
      %v1294 = vadd.f32 0.0, %v1293
      %v1295 = vpop.f32.mrf.mxu0
      %v1296 = vadd.f32 0.0, %v1295
      %1297 = vmatmul.bf16.gmra.mxu0 %v1138
      %v1298 = vpop.f32.mrf.mxu0
      %v1299 = vadd.f32 0.0, %v1298
      %v1300 = vpop.f32.mrf.mxu0
      %v1301 = vadd.f32 0.0, %v1300
      %1302 = vmatmul.bf16.gmra.mxu0 %v1141
      %v1303 = vpop.f32.mrf.mxu0
      %v1304 = vadd.f32 0.0, %v1303
      %v1305 = vpop.f32.mrf.mxu0
      %v1306 = vadd.f32 0.0, %v1305
      %1307 = vmatmul.bf16.gmra.mxu0 %v1144
      %v1308 = vpop.f32.mrf.mxu0
      %v1309 = vadd.f32 0.0, %v1308
      %v1310 = vpop.f32.mrf.mxu0
      %v1311 = vadd.f32 0.0, %v1310
      %1312 = vmatmul.bf16.gmra.mxu0 %v1147
      %v1313 = vpop.f32.mrf.mxu0
      %v1314 = vadd.f32 0.0, %v1313
      %v1315 = vpop.f32.mrf.mxu0
      %v1316 = vadd.f32 0.0, %v1315
      %1317 = vdwg.mxu0
      %v1382 = vunpack.c.l.b16 %v923
      %v1383 = vunpack.c.l.b16 %v924
      %v1384 = vunpack.c.l.b16 %v925
      %v1385 = vunpack.c.l.b16 %v926
      %v1386 = vunpack.c.l.b16 %v927
      %v1387 = vunpack.c.l.b16 %v928
      %v1388 = vunpack.c.l.b16 %v929
      %v1389 = vunpack.c.l.b16 %v930
      %v1390 = vunpack.c.l.b16 %v931
      %v1391 = vunpack.c.l.b16 %v932
      %v1392 = vunpack.c.l.b16 %v933
      %v1393 = vunpack.c.l.b16 %v934
      %v1394 = vunpack.c.l.b16 %v935
      %v1395 = vunpack.c.l.b16 %v936
      %v1396 = vunpack.c.l.b16 %v937
      %v1397 = vunpack.c.l.b16 %v938
      %v1398 = vunpack.c.l.b16 %v939
      %v1399 = vunpack.c.l.b16 %v940
      %v1400 = vunpack.c.l.b16 %v941
      %v1401 = vunpack.c.l.b16 %v942
      %v1402 = vunpack.c.l.b16 %v943
      %v1403 = vunpack.c.l.b16 %v944
      %v1404 = vunpack.c.l.b16 %v945
      %v1405 = vunpack.c.l.b16 %v946
      %v1406 = vunpack.c.l.b16 %v947
      %v1407 = vunpack.c.l.b16 %v948
      %v1408 = vunpack.c.l.b16 %v949
      %v1409 = vunpack.c.l.b16 %v950
      %v1410 = vunpack.c.l.b16 %v951
      %v1411 = vunpack.c.l.b16 %v952
      %v1412 = vunpack.c.l.b16 %v953
      %v1413 = vunpack.c.l.b16 %v954
      %v1414 = vunpack.c.l.b16 %v955
      %v1415 = vunpack.c.l.b16 %v956
      %v1416 = vunpack.c.l.b16 %v957
      %v1417 = vunpack.c.l.b16 %v958
      %v1418 = vunpack.c.l.b16 %v959
      %v1419 = vunpack.c.l.b16 %v960
      %v1420 = vunpack.c.l.b16 %v961
      %v1421 = vunpack.c.l.b16 %v962
      %v1422 = vunpack.c.l.b16 %v963
      %v1423 = vunpack.c.l.b16 %v964
      %v1424 = vunpack.c.l.b16 %v965
      %v1425 = vunpack.c.l.b16 %v966
      %v1426 = vunpack.c.l.b16 %v967
      %v1427 = vunpack.c.l.b16 %v968
      %v1428 = vunpack.c.l.b16 %v969
      %v1429 = vunpack.c.l.b16 %v970
      %v1430 = vunpack.c.l.b16 %v971
      %v1431 = vunpack.c.l.b16 %v972
      %v1432 = vunpack.c.l.b16 %v973
      %v1433 = vunpack.c.l.b16 %v974
      %v1434 = vunpack.c.l.b16 %v975
      %v1435 = vunpack.c.l.b16 %v976
      %v1436 = vunpack.c.l.b16 %v977
      %v1437 = vunpack.c.l.b16 %v978
      %v1438 = vunpack.c.l.b16 %v979
      %v1439 = vunpack.c.l.b16 %v980
      %v1440 = vunpack.c.l.b16 %v981
      %v1441 = vunpack.c.l.b16 %v982
      %v1442 = vunpack.c.l.b16 %v983
      %v1443 = vunpack.c.l.b16 %v984
      %v1444 = vunpack.c.l.b16 %v985
      %v1445 = vunpack.c.l.b16 %v986
      %v1446 = vpack.c.b16 %v1383, %v1382
      %v1447 = vpack.c.b16 %v1385, %v1384
      %v1448 = vpack.c.b16 %v1387, %v1386
      %v1449 = vpack.c.b16 %v1389, %v1388
      %v1450 = vpack.c.b16 %v1391, %v1390
      %v1451 = vpack.c.b16 %v1393, %v1392
      %v1452 = vpack.c.b16 %v1395, %v1394
      %v1453 = vpack.c.b16 %v1397, %v1396
      %v1454 = vpack.c.b16 %v1399, %v1398
      %v1455 = vpack.c.b16 %v1401, %v1400
      %v1456 = vpack.c.b16 %v1403, %v1402
      %v1457 = vpack.c.b16 %v1405, %v1404
      %v1458 = vpack.c.b16 %v1407, %v1406
      %v1459 = vpack.c.b16 %v1409, %v1408
      %v1460 = vpack.c.b16 %v1411, %v1410
      %v1461 = vpack.c.b16 %v1413, %v1412
      %v1462 = vpack.c.b16 %v1415, %v1414
      %v1463 = vpack.c.b16 %v1417, %v1416
      %v1464 = vpack.c.b16 %v1419, %v1418
      %v1465 = vpack.c.b16 %v1421, %v1420
      %v1466 = vpack.c.b16 %v1423, %v1422
      %v1467 = vpack.c.b16 %v1425, %v1424
      %v1468 = vpack.c.b16 %v1427, %v1426
      %v1469 = vpack.c.b16 %v1429, %v1428
      %v1470 = vpack.c.b16 %v1431, %v1430
      %v1471 = vpack.c.b16 %v1433, %v1432
      %v1472 = vpack.c.b16 %v1435, %v1434
      %v1473 = vpack.c.b16 %v1437, %v1436
      %v1474 = vpack.c.b16 %v1439, %v1438
      %v1475 = vpack.c.b16 %v1441, %v1440
      %v1476 = vpack.c.b16 %v1443, %v1442
      %v1477 = vpack.c.b16 %v1445, %v1444
      %vm1478 = vcmask 64512
      %v1480 = vsel %vm1478, %v1446, 0
      %v1483 = vsel %vm1478, %v1447, 0
      %v1486 = vsel %vm1478, %v1448, 0
      %v1489 = vsel %vm1478, %v1449, 0
      %v1492 = vsel %vm1478, %v1450, 0
      %v1495 = vsel %vm1478, %v1451, 0
      %v1498 = vsel %vm1478, %v1452, 0
      %v1501 = vsel %vm1478, %v1453, 0
      %v1504 = vsel %vm1478, %v1454, 0
      %v1507 = vsel %vm1478, %v1455, 0
      %v1510 = vsel %vm1478, %v1456, 0
      %v1513 = vsel %vm1478, %v1457, 0
      %v1516 = vsel %vm1478, %v1458, 0
      %v1519 = vsel %vm1478, %v1459, 0
      %v1522 = vsel %vm1478, %v1460, 0
      %v1525 = vsel %vm1478, %v1461, 0
      %v1528 = vsel %vm1478, %v1462, 0
      %v1531 = vsel %vm1478, %v1463, 0
      %v1534 = vsel %vm1478, %v1464, 0
      %v1537 = vsel %vm1478, %v1465, 0
      %v1540 = vsel %vm1478, %v1466, 0
      %v1543 = vsel %vm1478, %v1467, 0
      %v1546 = vsel %vm1478, %v1468, 0
      %v1549 = vsel %vm1478, %v1469, 0
      %v1552 = vsel %vm1478, %v1470, 0
      %v1555 = vsel %vm1478, %v1471, 0
      %v1558 = vsel %vm1478, %v1472, 0
      %v1561 = vsel %vm1478, %v1473, 0
      %v1564 = vsel %vm1478, %v1474, 0
      %v1567 = vsel %vm1478, %v1475, 0
      %v1570 = vsel %vm1478, %v1476, 0
      %v1573 = vsel %vm1478, %v1477, 0
      %vm1575 = vcmask 1043456
      %v1577 = vsel %vm1575, %v987, 0
      %1579 = vmatpush.bf16.msra.mxu0 0
      %1580 = vmatpush.bf16.msra.mxu0 0
      %1581 = vmatpush.bf16.msra.mxu0 0
      %1582 = vmatpush.bf16.msra.mxu0 0
      %1583 = vmatpush.bf16.msra.mxu0 0
      %1584 = vmatpush.bf16.msra.mxu0 0
      %1585 = vmatpush.bf16.msra.mxu0 0
      %1586 = vmatpush.bf16.msra.mxu0 %v1577
      %1587 = vmatmul.bf16.gmra.mxu0 %v1480
      %v1588 = vpop.f32.mrf.mxu0
      %v1589 = vadd.f32 %v1159, %v1588
      %v1590 = vpop.f32.mrf.mxu0
      %v1591 = vadd.f32 %v1161, %v1590
      %1592 = vmatmul.bf16.gmra.mxu0 %v1483
      %v1593 = vpop.f32.mrf.mxu0
      %v1594 = vadd.f32 %v1164, %v1593
      %v1595 = vpop.f32.mrf.mxu0
      %v1596 = vadd.f32 %v1166, %v1595
      %1597 = vmatmul.bf16.gmra.mxu0 %v1486
      %v1598 = vpop.f32.mrf.mxu0
      %v1599 = vadd.f32 %v1169, %v1598
      %v1600 = vpop.f32.mrf.mxu0
      %v1601 = vadd.f32 %v1171, %v1600
      %1602 = vmatmul.bf16.gmra.mxu0 %v1489
      %v1603 = vpop.f32.mrf.mxu0
      %v1604 = vadd.f32 %v1174, %v1603
      %v1605 = vpop.f32.mrf.mxu0
      %v1606 = vadd.f32 %v1176, %v1605
      %1607 = vmatmul.bf16.gmra.mxu0 %v1492
      %v1608 = vpop.f32.mrf.mxu0
      %v1609 = vadd.f32 %v1179, %v1608
      %v1610 = vpop.f32.mrf.mxu0
      %v1611 = vadd.f32 %v1181, %v1610
      %1612 = vmatmul.bf16.gmra.mxu0 %v1495
      %v1613 = vpop.f32.mrf.mxu0
      %v1614 = vadd.f32 %v1184, %v1613
      %v1615 = vpop.f32.mrf.mxu0
      %v1616 = vadd.f32 %v1186, %v1615
      %1617 = vmatmul.bf16.gmra.mxu0 %v1498
      %v1618 = vpop.f32.mrf.mxu0
      %v1619 = vadd.f32 %v1189, %v1618
      %v1620 = vpop.f32.mrf.mxu0
      %v1621 = vadd.f32 %v1191, %v1620
      %1622 = vmatmul.bf16.gmra.mxu0 %v1501
      %v1623 = vpop.f32.mrf.mxu0
      %v1624 = vadd.f32 %v1194, %v1623
      %v1625 = vpop.f32.mrf.mxu0
      %v1626 = vadd.f32 %v1196, %v1625
      %1627 = vmatmul.bf16.gmra.mxu0 %v1504
      %v1628 = vpop.f32.mrf.mxu0
      %v1629 = vadd.f32 %v1199, %v1628
      %v1630 = vpop.f32.mrf.mxu0
      %v1631 = vadd.f32 %v1201, %v1630
      %1632 = vmatmul.bf16.gmra.mxu0 %v1507
      %v1633 = vpop.f32.mrf.mxu0
      %v1634 = vadd.f32 %v1204, %v1633
      %v1635 = vpop.f32.mrf.mxu0
      %v1636 = vadd.f32 %v1206, %v1635
      %1637 = vmatmul.bf16.gmra.mxu0 %v1510
      %v1638 = vpop.f32.mrf.mxu0
      %v1639 = vadd.f32 %v1209, %v1638
      %v1640 = vpop.f32.mrf.mxu0
      %v1641 = vadd.f32 %v1211, %v1640
      %1642 = vmatmul.bf16.gmra.mxu0 %v1513
      %v1643 = vpop.f32.mrf.mxu0
      %v1644 = vadd.f32 %v1214, %v1643
      %v1645 = vpop.f32.mrf.mxu0
      %v1646 = vadd.f32 %v1216, %v1645
      %1647 = vmatmul.bf16.gmra.mxu0 %v1516
      %v1648 = vpop.f32.mrf.mxu0
      %v1649 = vadd.f32 %v1219, %v1648
      %v1650 = vpop.f32.mrf.mxu0
      %v1651 = vadd.f32 %v1221, %v1650
      %1652 = vmatmul.bf16.gmra.mxu0 %v1519
      %v1653 = vpop.f32.mrf.mxu0
      %v1654 = vadd.f32 %v1224, %v1653
      %v1655 = vpop.f32.mrf.mxu0
      %v1656 = vadd.f32 %v1226, %v1655
      %1657 = vmatmul.bf16.gmra.mxu0 %v1522
      %v1658 = vpop.f32.mrf.mxu0
      %v1659 = vadd.f32 %v1229, %v1658
      %v1660 = vpop.f32.mrf.mxu0
      %v1661 = vadd.f32 %v1231, %v1660
      %1662 = vmatmul.bf16.gmra.mxu0 %v1525
      %v1663 = vpop.f32.mrf.mxu0
      %v1664 = vadd.f32 %v1234, %v1663
      %v1665 = vpop.f32.mrf.mxu0
      %v1666 = vadd.f32 %v1236, %v1665
      %1667 = vmatmul.bf16.gmra.mxu0 %v1528
      %v1668 = vpop.f32.mrf.mxu0
      %v1669 = vadd.f32 %v1239, %v1668
      %v1670 = vpop.f32.mrf.mxu0
      %v1671 = vadd.f32 %v1241, %v1670
      %1672 = vmatmul.bf16.gmra.mxu0 %v1531
      %v1673 = vpop.f32.mrf.mxu0
      %v1674 = vadd.f32 %v1244, %v1673
      %v1675 = vpop.f32.mrf.mxu0
      %v1676 = vadd.f32 %v1246, %v1675
      %1677 = vmatmul.bf16.gmra.mxu0 %v1534
      %v1678 = vpop.f32.mrf.mxu0
      %v1679 = vadd.f32 %v1249, %v1678
      %v1680 = vpop.f32.mrf.mxu0
      %v1681 = vadd.f32 %v1251, %v1680
      %1682 = vmatmul.bf16.gmra.mxu0 %v1537
      %v1683 = vpop.f32.mrf.mxu0
      %v1684 = vadd.f32 %v1254, %v1683
      %v1685 = vpop.f32.mrf.mxu0
      %v1686 = vadd.f32 %v1256, %v1685
      %1687 = vmatmul.bf16.gmra.mxu0 %v1540
      %v1688 = vpop.f32.mrf.mxu0
      %v1689 = vadd.f32 %v1259, %v1688
      %v1690 = vpop.f32.mrf.mxu0
      %v1691 = vadd.f32 %v1261, %v1690
      %1692 = vmatmul.bf16.gmra.mxu0 %v1543
      %v1693 = vpop.f32.mrf.mxu0
      %v1694 = vadd.f32 %v1264, %v1693
      %v1695 = vpop.f32.mrf.mxu0
      %v1696 = vadd.f32 %v1266, %v1695
      %1697 = vmatmul.bf16.gmra.mxu0 %v1546
      %v1698 = vpop.f32.mrf.mxu0
      %v1699 = vadd.f32 %v1269, %v1698
      %v1700 = vpop.f32.mrf.mxu0
      %v1701 = vadd.f32 %v1271, %v1700
      %1702 = vmatmul.bf16.gmra.mxu0 %v1549
      %v1703 = vpop.f32.mrf.mxu0
      %v1704 = vadd.f32 %v1274, %v1703
      %v1705 = vpop.f32.mrf.mxu0
      %v1706 = vadd.f32 %v1276, %v1705
      %1707 = vmatmul.bf16.gmra.mxu0 %v1552
      %v1708 = vpop.f32.mrf.mxu0
      %v1709 = vadd.f32 %v1279, %v1708
      %v1710 = vpop.f32.mrf.mxu0
      %v1711 = vadd.f32 %v1281, %v1710
      %1712 = vmatmul.bf16.gmra.mxu0 %v1555
      %v1713 = vpop.f32.mrf.mxu0
      %v1714 = vadd.f32 %v1284, %v1713
      %v1715 = vpop.f32.mrf.mxu0
      %v1716 = vadd.f32 %v1286, %v1715
      %1717 = vmatmul.bf16.gmra.mxu0 %v1558
      %v1718 = vpop.f32.mrf.mxu0
      %v1719 = vadd.f32 %v1289, %v1718
      %v1720 = vpop.f32.mrf.mxu0
      %v1721 = vadd.f32 %v1291, %v1720
      %1722 = vmatmul.bf16.gmra.mxu0 %v1561
      %v1723 = vpop.f32.mrf.mxu0
      %v1724 = vadd.f32 %v1294, %v1723
      %v1725 = vpop.f32.mrf.mxu0
      %v1726 = vadd.f32 %v1296, %v1725
      %1727 = vmatmul.bf16.gmra.mxu0 %v1564
      %v1728 = vpop.f32.mrf.mxu0
      %v1729 = vadd.f32 %v1299, %v1728
      %v1730 = vpop.f32.mrf.mxu0
      %v1731 = vadd.f32 %v1301, %v1730
      %1732 = vmatmul.bf16.gmra.mxu0 %v1567
      %v1733 = vpop.f32.mrf.mxu0
      %v1734 = vadd.f32 %v1304, %v1733
      %v1735 = vpop.f32.mrf.mxu0
      %v1736 = vadd.f32 %v1306, %v1735
      %1737 = vmatmul.bf16.gmra.mxu0 %v1570
      %v1738 = vpop.f32.mrf.mxu0
      %v1739 = vadd.f32 %v1309, %v1738
      %v1740 = vpop.f32.mrf.mxu0
      %v1741 = vadd.f32 %v1311, %v1740
      %1742 = vmatmul.bf16.gmra.mxu0 %v1573
      %v1743 = vpop.f32.mrf.mxu0
      %v1744 = vadd.f32 %v1314, %v1743
      %v1745 = vpop.f32.mrf.mxu0
      %v1746 = vadd.f32 %v1316, %v1745
      %1747 = vdwg.mxu0
      %v1748 = vld [vmem:[%s5] sm:$0x1]
      %v1750 = vperm.slane %v1748, 0
      %v1752 = vadd.f32 %v1589, %v1750
      %v1753 = vadd.f32 %v1591, %v1750
      %v1754 = vadd.f32 %v1594, %v1750
      %v1755 = vadd.f32 %v1596, %v1750
      %v1756 = vadd.f32 %v1599, %v1750
      %v1757 = vadd.f32 %v1601, %v1750
      %v1758 = vadd.f32 %v1604, %v1750
      %v1759 = vadd.f32 %v1606, %v1750
      %v1760 = vadd.f32 %v1609, %v1750
      %v1761 = vadd.f32 %v1611, %v1750
      %v1762 = vadd.f32 %v1614, %v1750
      %v1763 = vadd.f32 %v1616, %v1750
      %v1764 = vadd.f32 %v1619, %v1750
      %v1765 = vadd.f32 %v1621, %v1750
      %v1766 = vadd.f32 %v1624, %v1750
      %v1767 = vadd.f32 %v1626, %v1750
      %v1768 = vadd.f32 %v1629, %v1750
      %v1769 = vadd.f32 %v1631, %v1750
      %v1770 = vadd.f32 %v1634, %v1750
      %v1771 = vadd.f32 %v1636, %v1750
      %v1772 = vadd.f32 %v1639, %v1750
      %v1773 = vadd.f32 %v1641, %v1750
      %v1774 = vadd.f32 %v1644, %v1750
      %v1775 = vadd.f32 %v1646, %v1750
      %v1776 = vadd.f32 %v1649, %v1750
      %v1777 = vadd.f32 %v1651, %v1750
      %v1778 = vadd.f32 %v1654, %v1750
      %v1779 = vadd.f32 %v1656, %v1750
      %v1780 = vadd.f32 %v1659, %v1750
      %v1781 = vadd.f32 %v1661, %v1750
      %v1782 = vadd.f32 %v1664, %v1750
      %v1783 = vadd.f32 %v1666, %v1750
      %v1784 = vadd.f32 %v1669, %v1750
      %v1785 = vadd.f32 %v1671, %v1750
      %v1786 = vadd.f32 %v1674, %v1750
      %v1787 = vadd.f32 %v1676, %v1750
      %v1788 = vadd.f32 %v1679, %v1750
      %v1789 = vadd.f32 %v1681, %v1750
      %v1790 = vadd.f32 %v1684, %v1750
      %v1791 = vadd.f32 %v1686, %v1750
      %v1792 = vadd.f32 %v1689, %v1750
      %v1793 = vadd.f32 %v1691, %v1750
      %v1794 = vadd.f32 %v1694, %v1750
      %v1795 = vadd.f32 %v1696, %v1750
      %v1796 = vadd.f32 %v1699, %v1750
      %v1797 = vadd.f32 %v1701, %v1750
      %v1798 = vadd.f32 %v1704, %v1750
      %v1799 = vadd.f32 %v1706, %v1750
      %v1800 = vadd.f32 %v1709, %v1750
      %v1801 = vadd.f32 %v1711, %v1750
      %v1802 = vadd.f32 %v1714, %v1750
      %v1803 = vadd.f32 %v1716, %v1750
      %v1804 = vadd.f32 %v1719, %v1750
      %v1805 = vadd.f32 %v1721, %v1750
      %v1806 = vadd.f32 %v1724, %v1750
      %v1807 = vadd.f32 %v1726, %v1750
      %v1808 = vadd.f32 %v1729, %v1750
      %v1809 = vadd.f32 %v1731, %v1750
      %v1810 = vadd.f32 %v1734, %v1750
      %v1811 = vadd.f32 %v1736, %v1750
      %v1812 = vadd.f32 %v1739, %v1750
      %v1813 = vadd.f32 %v1741, %v1750
      %v1814 = vadd.f32 %v1744, %v1750
      %v1815 = vadd.f32 %v1746, %v1750
      %v1816 = vmax.f32 %v1752, 0.0
      %v1817 = vmax.f32 %v1753, 0.0
      %v1818 = vmax.f32 %v1754, 0.0
      %v1819 = vmax.f32 %v1755, 0.0
      %v1820 = vmax.f32 %v1756, 0.0
      %v1821 = vmax.f32 %v1757, 0.0
      %v1822 = vmax.f32 %v1758, 0.0
      %v1823 = vmax.f32 %v1759, 0.0
      %v1824 = vmax.f32 %v1760, 0.0
      %v1825 = vmax.f32 %v1761, 0.0
      %v1826 = vmax.f32 %v1762, 0.0
      %v1827 = vmax.f32 %v1763, 0.0
      %v1828 = vmax.f32 %v1764, 0.0
      %v1829 = vmax.f32 %v1765, 0.0
      %v1830 = vmax.f32 %v1766, 0.0
      %v1831 = vmax.f32 %v1767, 0.0
      %v1832 = vmax.f32 %v1768, 0.0
      %v1833 = vmax.f32 %v1769, 0.0
      %v1834 = vmax.f32 %v1770, 0.0
      %v1835 = vmax.f32 %v1771, 0.0
      %v1836 = vmax.f32 %v1772, 0.0
      %v1837 = vmax.f32 %v1773, 0.0
      %v1838 = vmax.f32 %v1774, 0.0
      %v1839 = vmax.f32 %v1775, 0.0
      %v1840 = vmax.f32 %v1776, 0.0
      %v1841 = vmax.f32 %v1777, 0.0
      %v1842 = vmax.f32 %v1778, 0.0
      %v1843 = vmax.f32 %v1779, 0.0
      %v1844 = vmax.f32 %v1780, 0.0
      %v1845 = vmax.f32 %v1781, 0.0
      %v1846 = vmax.f32 %v1782, 0.0
      %v1847 = vmax.f32 %v1783, 0.0
      %v1848 = vmax.f32 %v1784, 0.0
      %v1849 = vmax.f32 %v1785, 0.0
      %v1850 = vmax.f32 %v1786, 0.0
      %v1851 = vmax.f32 %v1787, 0.0
      %v1852 = vmax.f32 %v1788, 0.0
      %v1853 = vmax.f32 %v1789, 0.0
      %v1854 = vmax.f32 %v1790, 0.0
      %v1855 = vmax.f32 %v1791, 0.0
      %v1856 = vmax.f32 %v1792, 0.0
      %v1857 = vmax.f32 %v1793, 0.0
      %v1858 = vmax.f32 %v1794, 0.0
      %v1859 = vmax.f32 %v1795, 0.0
      %v1860 = vmax.f32 %v1796, 0.0
      %v1861 = vmax.f32 %v1797, 0.0
      %v1862 = vmax.f32 %v1798, 0.0
      %v1863 = vmax.f32 %v1799, 0.0
      %v1864 = vmax.f32 %v1800, 0.0
      %v1865 = vmax.f32 %v1801, 0.0
      %v1866 = vmax.f32 %v1802, 0.0
      %v1867 = vmax.f32 %v1803, 0.0
      %v1868 = vmax.f32 %v1804, 0.0
      %v1869 = vmax.f32 %v1805, 0.0
      %v1870 = vmax.f32 %v1806, 0.0
      %v1871 = vmax.f32 %v1807, 0.0
      %v1872 = vmax.f32 %v1808, 0.0
      %v1873 = vmax.f32 %v1809, 0.0
      %v1874 = vmax.f32 %v1810, 0.0
      %v1875 = vmax.f32 %v1811, 0.0
      %v1876 = vmax.f32 %v1812, 0.0
      %v1877 = vmax.f32 %v1813, 0.0
      %v1878 = vmax.f32 %v1814, 0.0
      %v1879 = vmax.f32 %v1815, 0.0
      %1880 = vst.msk [vmem:[%s275] sm:$0xff] %vm1478, %v1816
      %1881 = vst.msk [vmem:[%s275 + $0x8] sm:$0xff] %vm1478, %v1817
      %1882 = vst.msk [vmem:[%s275 + $0x10] sm:$0xff] %vm1478, %v1818
      %1883 = vst.msk [vmem:[%s275 + $0x18] sm:$0xff] %vm1478, %v1819
      %1884 = vst.msk [vmem:[%s275 + $0x20] sm:$0xff] %vm1478, %v1820
      %1885 = vst.msk [vmem:[%s275 + $0x28] sm:$0xff] %vm1478, %v1821
      %1886 = vst.msk [vmem:[%s275 + $0x30] sm:$0xff] %vm1478, %v1822
      %1887 = vst.msk [vmem:[%s275 + $0x38] sm:$0xff] %vm1478, %v1823
      %1888 = vst.msk [vmem:[%s275 + $0x40] sm:$0xff] %vm1478, %v1824
      %1889 = vst.msk [vmem:[%s275 + $0x48] sm:$0xff] %vm1478, %v1825
      %1890 = vst.msk [vmem:[%s275 + $0x50] sm:$0xff] %vm1478, %v1826
      %1891 = vst.msk [vmem:[%s275 + $0x58] sm:$0xff] %vm1478, %v1827
      %1892 = vst.msk [vmem:[%s275 + $0x60] sm:$0xff] %vm1478, %v1828
      %1893 = vst.msk [vmem:[%s275 + $0x68] sm:$0xff] %vm1478, %v1829
      %1894 = vst.msk [vmem:[%s275 + $0x70] sm:$0xff] %vm1478, %v1830
      %1895 = vst.msk [vmem:[%s275 + $0x78] sm:$0xff] %vm1478, %v1831
      %1896 = vst.msk [vmem:[%s275 + $0x80] sm:$0xff] %vm1478, %v1832
      %1897 = vst.msk [vmem:[%s275 + $0x88] sm:$0xff] %vm1478, %v1833
      %1898 = vst.msk [vmem:[%s275 + $0x90] sm:$0xff] %vm1478, %v1834
      %1899 = vst.msk [vmem:[%s275 + $0x98] sm:$0xff] %vm1478, %v1835
      %1900 = vst.msk [vmem:[%s275 + $0xa0] sm:$0xff] %vm1478, %v1836
      %1901 = vst.msk [vmem:[%s275 + $0xa8] sm:$0xff] %vm1478, %v1837
      %1902 = vst.msk [vmem:[%s275 + $0xb0] sm:$0xff] %vm1478, %v1838
      %1903 = vst.msk [vmem:[%s275 + $0xb8] sm:$0xff] %vm1478, %v1839
      %1904 = vst.msk [vmem:[%s275 + $0xc0] sm:$0xff] %vm1478, %v1840
      %1905 = vst.msk [vmem:[%s275 + $0xc8] sm:$0xff] %vm1478, %v1841
      %1906 = vst.msk [vmem:[%s275 + $0xd0] sm:$0xff] %vm1478, %v1842
      %1907 = vst.msk [vmem:[%s275 + $0xd8] sm:$0xff] %vm1478, %v1843
      %1908 = vst.msk [vmem:[%s275 + $0xe0] sm:$0xff] %vm1478, %v1844
      %1909 = vst.msk [vmem:[%s275 + $0xe8] sm:$0xff] %vm1478, %v1845
      %1910 = vst.msk [vmem:[%s275 + $0xf0] sm:$0xff] %vm1478, %v1846
      %1911 = vst.msk [vmem:[%s275 + $0xf8] sm:$0xff] %vm1478, %v1847
      %1912 = vst.msk [vmem:[%s275 + $0x100] sm:$0xff] %vm1478, %v1848
      %1913 = vst.msk [vmem:[%s275 + $0x108] sm:$0xff] %vm1478, %v1849
      %1914 = vst.msk [vmem:[%s275 + $0x110] sm:$0xff] %vm1478, %v1850
      %1915 = vst.msk [vmem:[%s275 + $0x118] sm:$0xff] %vm1478, %v1851
      %1916 = vst.msk [vmem:[%s275 + $0x120] sm:$0xff] %vm1478, %v1852
      %1917 = vst.msk [vmem:[%s275 + $0x128] sm:$0xff] %vm1478, %v1853
      %1918 = vst.msk [vmem:[%s275 + $0x130] sm:$0xff] %vm1478, %v1854
      %1919 = vst.msk [vmem:[%s275 + $0x138] sm:$0xff] %vm1478, %v1855
      %1920 = vst.msk [vmem:[%s275 + $0x140] sm:$0xff] %vm1478, %v1856
      %1921 = vst.msk [vmem:[%s275 + $0x148] sm:$0xff] %vm1478, %v1857
      %1922 = vst.msk [vmem:[%s275 + $0x150] sm:$0xff] %vm1478, %v1858
      %1923 = vst.msk [vmem:[%s275 + $0x158] sm:$0xff] %vm1478, %v1859
      %1924 = vst.msk [vmem:[%s275 + $0x160] sm:$0xff] %vm1478, %v1860
      %1925 = vst.msk [vmem:[%s275 + $0x168] sm:$0xff] %vm1478, %v1861
      %1926 = vst.msk [vmem:[%s275 + $0x170] sm:$0xff] %vm1478, %v1862
      %1927 = vst.msk [vmem:[%s275 + $0x178] sm:$0xff] %vm1478, %v1863
      %1928 = vst.msk [vmem:[%s275 + $0x180] sm:$0xff] %vm1478, %v1864
      %1929 = vst.msk [vmem:[%s275 + $0x188] sm:$0xff] %vm1478, %v1865
      %1930 = vst.msk [vmem:[%s275 + $0x190] sm:$0xff] %vm1478, %v1866
      %1931 = vst.msk [vmem:[%s275 + $0x198] sm:$0xff] %vm1478, %v1867
      %1932 = vst.msk [vmem:[%s275 + $0x1a0] sm:$0xff] %vm1478, %v1868
      %1933 = vst.msk [vmem:[%s275 + $0x1a8] sm:$0xff] %vm1478, %v1869
      %1934 = vst.msk [vmem:[%s275 + $0x1b0] sm:$0xff] %vm1478, %v1870
      %1935 = vst.msk [vmem:[%s275 + $0x1b8] sm:$0xff] %vm1478, %v1871
      %1936 = vst.msk [vmem:[%s275 + $0x1c0] sm:$0xff] %vm1478, %v1872
      %1937 = vst.msk [vmem:[%s275 + $0x1c8] sm:$0xff] %vm1478, %v1873
      %1938 = vst.msk [vmem:[%s275 + $0x1d0] sm:$0xff] %vm1478, %v1874
      %1939 = vst.msk [vmem:[%s275 + $0x1d8] sm:$0xff] %vm1478, %v1875
      %1940 = vst.msk [vmem:[%s275 + $0x1e0] sm:$0xff] %vm1478, %v1876
      %1941 = vst.msk [vmem:[%s275 + $0x1e8] sm:$0xff] %vm1478, %v1877
      %1942 = vst.msk [vmem:[%s275 + $0x1f0] sm:$0xff] %vm1478, %v1878
      %1943 = vst.msk [vmem:[%s275 + $0x1f8] sm:$0xff] %vm1478, %v1879
      %s1944 = smul.u32 64, %s17
      %p1945 = scmp.lt.s32.totalorder %s1944, 255
      %s1946 = scalar_select %p1945, %s1944, 255
      %s1947 = smul.addr %s1946, 8
      %s1948 = scalar_lea.vmem %s6, %s1947
      // Predicated region
      $region45: #{qconv_forward.1} parent=43 // pred_check
        %p1949 = pneg %p171
      $region46: #{qconv_forward.1} parent=43 // pred_check_branch
        %1951 = sbr.rel (%p1949) target = $region48
      $region47: #{qconv_forward.1} parent=43 // pred_region
        %s1952 = smul.u32 64, %s17
      $region48: #{qconv_forward.1} parent=43 // pred_fallthru
        _
    $region44: #{qconv_forward.1} parent=5 // pred_fallthru
      _
    %p1953 = scmp.le.s32.totalorder 2, %s12
    // Predicated region
    $region49: #{qconv_forward.1} parent=5 // pred_check
      %p1954 = pneg %p1953
    $region50: #{qconv_forward.1} parent=5 // pred_check_branch
      %1956 = sbr.rel (%p1954) target = $region52
    $region51: #{qconv_forward.1} parent=5 // pred_region
      %s1957 = ssub.s32 %s12, 2
      // Predicated region
      $region53: #{qconv_forward.1} parent=51 // pred_check
        %p1958 = pneg %p177
      $region54: #{qconv_forward.1} parent=51 // pred_check_branch
        %1960 = sbr.rel (%p1958) target = $region56
      $region55: #{qconv_forward.1} parent=51 // pred_region
        %s1961 = smul.u32 64, %s18
        %p1962 = scmp.lt.s32.totalorder %s1961, 255
        %s1963 = scalar_select %p1962, %s1961, 255
        %s1964 = smul.addr %s1963, 8
        %s1965 = scalar_lea.vmem %s6, %s1964
      $region56: #{qconv_forward.1} parent=51 // pred_fallthru
        _
    $region52: #{qconv_forward.1} parent=5 // pred_fallthru
      _
  $region6: #{qconv_forward.1} parent=0 // loop_footer
    %s16 = sadd.s32 1, %s12
  $region7: #{qconv_forward.1} parent=0 // loop_footer_branch
    %11 = sbr.rel target = $region3
  $region8: #{qconv_forward.1} parent=0 // loop_exit
    _

</llo_original>
